<compile_context>
chip_gen: v7x
topology: tpu7x:2x2x1
jax: 0.10.0
libtpu: 0.0.40
codegen_flags: <defaults>
</compile_context>

<pallas_src>
import jax
import jax.numpy as jnp
from jax.experimental import pallas as pl
from jax.experimental.pallas import tpu as pltpu

IN_DIM = 32 * 32 * 3  # 3072
OUT_DIM = 10


def mlp_kernel(x_ref, w1_ref, b1_ref, w2_ref, b2_ref, o_ref):
    # fc1: (TM, 3072)bf16 @ (3072, M)bf16 -> f32 acc, + bias, ReLU
    h = jnp.dot(x_ref[...], w1_ref[...], preferred_element_type=jnp.float32)
    h = jnp.maximum(h + b1_ref[...], 0.0)
    # fc2: (TM, M) @ (M, 10) -> f32 acc, + bias
    out = jnp.dot(h, w2_ref[...], preferred_element_type=jnp.float32)
    out = out + b2_ref[...]
    o_ref[...] = out.astype(o_ref.dtype)


def second_net_forward(x_nchw, w1, b1, w2, b2, *, max_tile=256):
    """x_nchw: (B, 3, 32, 32) float32.  w1: (3072, M), w2: (M, 10) (torch W.T).

    Returns (B, 10) float32 logits.
    """
    B = x_nchw.shape[0]
    M = w1.shape[1]

    # Glue: flatten exactly like torch's x.view(-1, 3072) on contiguous NCHW,
    # then cast activations / weights to bf16 for the MXU (f32 accumulate).
    x_flat = x_nchw.reshape(B, IN_DIM).astype(jnp.bfloat16)
    w1_b = w1.astype(jnp.bfloat16)
    w2_b = w2.astype(jnp.bfloat16)
    b1_2d = b1.reshape(1, M).astype(jnp.float32)
    b2_2d = b2.reshape(1, OUT_DIM).astype(jnp.float32)

    # Batch tile: multiple of 8 (sublane), capped at max_tile (fills the
    # 256-row MXU on v6e/v7x; still fine on v5e's 128x128 MXU).
    tm = min(max_tile, max(8, ((B + 7) // 8) * 8))
    b_pad = pl.cdiv(B, tm) * tm
    if b_pad != B:
        x_flat = jnp.pad(x_flat, ((0, b_pad - B), (0, 0)))

    grid = (b_pad // tm,)

    out_padded = pl.pallas_call(
        mlp_kernel,
        out_shape=jax.ShapeDtypeStruct((b_pad, OUT_DIM), jnp.float32),
        grid=grid,
        in_specs=[
            pl.BlockSpec((tm, IN_DIM), lambda i: (i, 0)),      # x tile (pipelined)
            pl.BlockSpec((IN_DIM, M), lambda i: (0, 0)),        # w1 resident
            pl.BlockSpec((1, M), lambda i: (0, 0)),             # b1 resident
            pl.BlockSpec((M, OUT_DIM), lambda i: (0, 0)),       # w2 resident
            pl.BlockSpec((1, OUT_DIM), lambda i: (0, 0)),       # b2 resident
        ],
        out_specs=pl.BlockSpec((tm, OUT_DIM), lambda i: (i, 0)),
        compiler_params=pltpu.CompilerParams(
            dimension_semantics=("parallel",),
        ),
    )(x_flat, w1_b, b1_2d, w2_b, b2_2d)

    return out_padded[:B]


def reference_forward_f32(x_nchw, w1, b1, w2, b2):
    x = x_nchw.reshape(x_nchw.shape[0], -1)
    h = jnp.maximum(x @ w1 + b1, 0.0)
    return h @ w2 + b2


def reference_forward_bf16(x_nchw, w1, b1, w2, b2):
    # Same bf16-input / f32-accumulate math as the kernel.
    x = x_nchw.reshape(x_nchw.shape[0], -1).astype(jnp.bfloat16)
    h = jnp.dot(x, w1.astype(jnp.bfloat16), preferred_element_type=jnp.float32)
    h = jnp.maximum(h + b1, 0.0)
    out = jnp.dot(h, w2.astype(jnp.bfloat16), preferred_element_type=jnp.float32)
    return out + b2


if __name__ == "__main__":
    B = 2          # batch
    M = 32         # hidden width (the module's M)

    key = jax.random.PRNGKey(0)
    kx, kw1, kb1, kw2, kb2 = jax.random.split(key, 5)

    # Deterministic synthetic parameters (shapes from nn.Linear in __init__,
    # stored transposed: (in, out) so the kernel computes x @ W + b).
    x = jax.random.normal(kx, (B, 3, 32, 32), dtype=jnp.float32)
    w1 = jax.random.normal(kw1, (IN_DIM, M), dtype=jnp.float32) * 0.02   # fc1.weight.T
    b1 = jax.random.normal(kb1, (M,), dtype=jnp.float32) * 0.02          # fc1.bias
    w2 = jax.random.normal(kw2, (M, OUT_DIM), dtype=jnp.float32) * 0.02  # fc2.weight.T
    b2 = jax.random.normal(kb2, (OUT_DIM,), dtype=jnp.float32) * 0.02    # fc2.bias

    out = second_net_forward(x, w1, b1, w2, b2)
    out = jax.block_until_ready(out)
    assert out.shape == (B, OUT_DIM), out.shape

    # Tight check vs a reference using identical bf16-input / f32-acc math.
    ref_bf16 = reference_forward_bf16(x, w1, b1, w2, b2)
    assert jnp.allclose(out, ref_bf16, atol=2e-3, rtol=2e-3), "mismatch vs bf16 reference"

    # Loose sanity check vs the pure-f32 PyTorch-equivalent math.
    ref_f32 = reference_forward_f32(x, w1, b1, w2, b2)
    assert jnp.allclose(out, ref_f32, atol=5e-2, rtol=5e-2), "mismatch vs f32 reference"

    print("KERNEL_OK")
</pallas_src>

<mosaic_0001>
module attributes {stable_mosaic.version = 11 : i64} {
  func.func @mlp_kernel(%arg0: i32, %arg1: memref<8x3072xbf16, #tpu.memory_space<vmem>>, %arg2: memref<3072x32xbf16, #tpu.memory_space<vmem>>, %arg3: memref<1x32xf32, #tpu.memory_space<vmem>>, %arg4: memref<32x10xbf16, #tpu.memory_space<vmem>>, %arg5: memref<1x10xf32, #tpu.memory_space<vmem>>, %arg6: memref<8x10xf32, #tpu.memory_space<vmem>>) attributes {dimension_semantics = [#tpu.dimension_semantics<parallel>], iteration_bounds = array<i64: 1>, scalar_prefetch = 0 : i64, scratch_operands = 0 : i64, tpu.core_type = #tpu.core_type<tc>, window_params = [{transform_indices = @transform_0, window_bounds = array<i64: 8, 3072>}, {pipeline_mode = #tpu.pipeline_mode<synchronous>, transform_indices = @transform_1, window_bounds = array<i64: 3072, 32>}, {pipeline_mode = #tpu.pipeline_mode<synchronous>, transform_indices = @transform_2, window_bounds = array<i64: 1, 32>}, {pipeline_mode = #tpu.pipeline_mode<synchronous>, transform_indices = @transform_3, window_bounds = array<i64: 32, 10>}, {pipeline_mode = #tpu.pipeline_mode<synchronous>, transform_indices = @transform_4, window_bounds = array<i64: 1, 10>}, {transform_indices = @transform_5, window_bounds = array<i64: 8, 10>}]} {
    %c0 = arith.constant 0 : index
    %c0_0 = arith.constant 0 : index
    %0 = vector.load %arg1[%c0, %c0_0] : memref<8x3072xbf16, #tpu.memory_space<vmem>>, vector<8x3072xbf16>
    %c0_1 = arith.constant 0 : index
    %c0_2 = arith.constant 0 : index
    %1 = vector.load %arg2[%c0_1, %c0_2] : memref<3072x32xbf16, #tpu.memory_space<vmem>>, vector<3072x32xbf16>
    %cst = arith.constant dense<0.000000e+00> : vector<8x32xf32>
    %2 = tpu.matmul %0, %1, %cst {dimension_numbers = #tpu.dot_dimension_numbers<[1], [0], [0], [1], [0, 0, 1, 1], [], []>} : vector<8x3072xbf16>, vector<3072x32xbf16>, vector<8x32xf32> -> vector<8x32xf32>
    %c0_3 = arith.constant 0 : index
    %c0_4 = arith.constant 0 : index
    %3 = vector.load %arg3[%c0_3, %c0_4] : memref<1x32xf32, #tpu.memory_space<vmem>>, vector<1x32xf32>
    %4 = vector.broadcast %3 : vector<1x32xf32> to vector<8x32xf32>
    %5 = arith.addf %2, %4 : vector<8x32xf32>
    %cst_5 = arith.constant 0.000000e+00 : f32
    %6 = vector.broadcast %cst_5 : f32 to vector<8x32xf32>
    %7 = arith.maximumf %5, %6 : vector<8x32xf32>
    %c0_6 = arith.constant 0 : index
    %c0_7 = arith.constant 0 : index
    %8 = vector.load %arg4[%c0_6, %c0_7] : memref<32x10xbf16, #tpu.memory_space<vmem>>, vector<32x10xbf16>
    %cst_8 = arith.constant dense<0.000000e+00> : vector<8x10xf32>
    %9 = tpu.matmul %7, %8, %cst_8 {dimension_numbers = #tpu.dot_dimension_numbers<[1], [0], [0], [1], [0, 0, 1, 1], [], []>} : vector<8x32xf32>, vector<32x10xbf16>, vector<8x10xf32> -> vector<8x10xf32>
    %c0_9 = arith.constant 0 : index
    %c0_10 = arith.constant 0 : index
    %10 = vector.load %arg5[%c0_9, %c0_10] : memref<1x10xf32, #tpu.memory_space<vmem>>, vector<1x10xf32>
    %11 = vector.broadcast %10 : vector<1x10xf32> to vector<8x10xf32>
    %12 = arith.addf %9, %11 : vector<8x10xf32>
    %c0_11 = arith.constant 0 : index
    %c0_12 = arith.constant 0 : index
    %13 = vector.load %arg6[%c0_11, %c0_12] : memref<8x10xf32, #tpu.memory_space<vmem>>, vector<8x10xf32>
    tpu.vector_store %arg6[%c0_11, %c0_12], %12 {strides = array<i32>} : memref<8x10xf32, #tpu.memory_space<vmem>>, vector<8x10xf32>,
    return
  }
  func.func @transform_0(%arg0: i32) -> (i32, i32) {
    %c0_i32 = arith.constant 0 : i32
    %c0_i32_0 = arith.constant 0 : i32
    return %arg0, %c0_i32 : i32, i32
  }
  func.func @transform_1(%arg0: i32) -> (i32, i32) {
    %c0_i32 = arith.constant 0 : i32
    %c0_i32_0 = arith.constant 0 : i32
    %c0_i32_1 = arith.constant 0 : i32
    return %c0_i32, %c0_i32_0 : i32, i32
  }
  func.func @transform_2(%arg0: i32) -> (i32, i32) {
    %c0_i32 = arith.constant 0 : i32
    %c0_i32_0 = arith.constant 0 : i32
    %c0_i32_1 = arith.constant 0 : i32
    return %c0_i32, %c0_i32_0 : i32, i32
  }
  func.func @transform_3(%arg0: i32) -> (i32, i32) {
    %c0_i32 = arith.constant 0 : i32
    %c0_i32_0 = arith.constant 0 : i32
    %c0_i32_1 = arith.constant 0 : i32
    return %c0_i32, %c0_i32_0 : i32, i32
  }
  func.func @transform_4(%arg0: i32) -> (i32, i32) {
    %c0_i32 = arith.constant 0 : i32
    %c0_i32_0 = arith.constant 0 : i32
    %c0_i32_1 = arith.constant 0 : i32
    return %c0_i32, %c0_i32_0 : i32, i32
  }
  func.func @transform_5(%arg0: i32) -> (i32, i32) {
    %c0_i32 = arith.constant 0 : i32
    %c0_i32_0 = arith.constant 0 : i32
    return %arg0, %c0_i32 : i32, i32
  }
}

</mosaic_0001>

<llo_original>
// kernel: tpu_custom_call.1
$region0: #{tpu_custom_call.1}
  #allocation0 [shape = 'u32[]', space=smem, size = 0x4, offset = 0x4, fixed_abs, tag = 'smem constant byte address 0x4 - core index']
  #allocation1 [shape = 'u32[144,128]{1,0:T(1,128)}', space=vmem, size = 0x12000, scoped, tag = 'internal scratch']
  %s0 = inlined_call_operand.vmem [shape: bf16[8,3072], index: 0, kind: input, shape index: {}]
  %s1 = inlined_call_operand.vmem [shape: bf16[3072,32], index: 1, kind: input, shape index: {}]
  %s2 = inlined_call_operand.vmem [shape: f32[1,32], index: 2, kind: input, shape index: {}]
  %s3 = inlined_call_operand.vmem [shape: bf16[32,10], index: 3, kind: input, shape index: {}]
  %s4 = inlined_call_operand.vmem [shape: f32[1,10], index: 4, kind: input, shape index: {}]
  %s5 = inlined_call_operand.hbm [shape: f32[8,10], index: 5, kind: output, shape index: {}]
  %s6 = sld [smem:[#allocation0]]
  $region30: #{tpu_custom_call.1} parent=0
    _
  %s8 = ssub.s32 1, %s6
  %s9 = scalar_select 0, %s8, %s6
  $region1: #{tpu_custom_call.1} parent=0
    #allocation2 [shape = 'u8[4096]{0}', space=vmem, size = 0x1000, scoped, tag = 'output window, operand 0, single buffered']
    #allocation3 [shape = 's32[1]{0}', space=sflag, size = 0x4, scoped, tag = 'scoped memory for tpu_custom_call.1']
    %10 = vsyncpa [#allocation3], 0
    // Predicated region
    $region2: #{tpu_custom_call.1} parent=1 // pred_check
      _
    $region3: #{tpu_custom_call.1} parent=1 // pred_check_branch
      %12 = sbr.rel (0) target = $region5
    $region4: #{tpu_custom_call.1} parent=1 // pred_region
      _
    $region5: #{tpu_custom_call.1} parent=1 // pred_fallthru
      _
    // Predicated region
    $region6: #{tpu_custom_call.1} parent=1 // pred_check
      _
    $region7: #{tpu_custom_call.1} parent=1 // pred_check_branch
      %14 = sbr.rel (0) target = $region9
    $region8: #{tpu_custom_call.1} parent=1 // pred_region
      _
    $region9: #{tpu_custom_call.1} parent=1 // pred_fallthru
      _
    // Predicated region
    $region10: #{tpu_custom_call.1} parent=1 // pred_check
      _
    $region11: #{tpu_custom_call.1} parent=1 // pred_check_branch
      %16 = sbr.rel (0) target = $region13
    $region12: #{tpu_custom_call.1} parent=1 // pred_region
      _
    $region13: #{tpu_custom_call.1} parent=1 // pred_fallthru
      _
    // Predicated region
    $region14: #{tpu_custom_call.1} parent=1 // pred_check
      _
    $region15: #{tpu_custom_call.1} parent=1 // pred_check_branch
      %18 = sbr.rel (0) target = $region17
    $region16: #{tpu_custom_call.1} parent=1 // pred_region
      _
    $region17: #{tpu_custom_call.1} parent=1 // pred_fallthru
      _
    // Predicated region
    $region18: #{tpu_custom_call.1} parent=1 // pred_check
      _
    $region19: #{tpu_custom_call.1} parent=1 // pred_check_branch
      %20 = sbr.rel (0) target = $region21
    $region20: #{tpu_custom_call.1} parent=1 // pred_region
      _
    $region21: #{tpu_custom_call.1} parent=1 // pred_fallthru
      _
    %v22 = vld [vmem:[%s0] sm:$0xff]
    %v23 = vld [vmem:[%s0 + $0x8] sm:$0xff]
    %v24 = vld [vmem:[%s0 + $0x10] sm:$0xff]
    %v25 = vld [vmem:[%s0 + $0x18] sm:$0xff]
    %v26 = vld [vmem:[%s0 + $0x20] sm:$0xff]
    %v27 = vld [vmem:[%s0 + $0x28] sm:$0xff]
    %v28 = vld [vmem:[%s0 + $0x30] sm:$0xff]
    %v29 = vld [vmem:[%s0 + $0x38] sm:$0xff]
    %v30 = vld [vmem:[%s0 + $0x40] sm:$0xff]
    %v31 = vld [vmem:[%s0 + $0x48] sm:$0xff]
    %v32 = vld [vmem:[%s0 + $0x50] sm:$0xff]
    %v33 = vld [vmem:[%s0 + $0x58] sm:$0xff]
    %v34 = vld [vmem:[%s1] sm:$0xf]
    %v35 = vld [vmem:[%s1 + $0x4] sm:$0xf]
    %v36 = vld [vmem:[%s1 + $0x8] sm:$0xf]
    %v37 = vld [vmem:[%s1 + $0xc] sm:$0xf]
    %v38 = vld [vmem:[%s1 + $0x10] sm:$0xf]
    %v39 = vld [vmem:[%s1 + $0x14] sm:$0xf]
    %v40 = vld [vmem:[%s1 + $0x18] sm:$0xf]
    %v41 = vld [vmem:[%s1 + $0x1c] sm:$0xf]
    %v42 = vld [vmem:[%s1 + $0x20] sm:$0xf]
    %v43 = vld [vmem:[%s1 + $0x24] sm:$0xf]
    %v44 = vld [vmem:[%s1 + $0x28] sm:$0xf]
    %v45 = vld [vmem:[%s1 + $0x2c] sm:$0xf]
    %v46 = vld [vmem:[%s1 + $0x30] sm:$0xf]
    %v47 = vld [vmem:[%s1 + $0x34] sm:$0xf]
    %v48 = vld [vmem:[%s1 + $0x38] sm:$0xf]
    %v49 = vld [vmem:[%s1 + $0x3c] sm:$0xf]
    %v50 = vld [vmem:[%s1 + $0x40] sm:$0xf]
    %v51 = vld [vmem:[%s1 + $0x44] sm:$0xf]
    %v52 = vld [vmem:[%s1 + $0x48] sm:$0xf]
    %v53 = vld [vmem:[%s1 + $0x4c] sm:$0xf]
    %v54 = vld [vmem:[%s1 + $0x50] sm:$0xf]
    %v55 = vld [vmem:[%s1 + $0x54] sm:$0xf]
    %v56 = vld [vmem:[%s1 + $0x58] sm:$0xf]
    %v57 = vld [vmem:[%s1 + $0x5c] sm:$0xf]
    %v58 = vld [vmem:[%s1 + $0x60] sm:$0xf]
    %v59 = vld [vmem:[%s1 + $0x64] sm:$0xf]
    %v60 = vld [vmem:[%s1 + $0x68] sm:$0xf]
    %v61 = vld [vmem:[%s1 + $0x6c] sm:$0xf]
    %v62 = vld [vmem:[%s1 + $0x70] sm:$0xf]
    %v63 = vld [vmem:[%s1 + $0x74] sm:$0xf]
    %v64 = vld [vmem:[%s1 + $0x78] sm:$0xf]
    %v65 = vld [vmem:[%s1 + $0x7c] sm:$0xf]
    %v66 = vld [vmem:[%s1 + $0x80] sm:$0xf]
    %v67 = vld [vmem:[%s1 + $0x84] sm:$0xf]
    %v68 = vld [vmem:[%s1 + $0x88] sm:$0xf]
    %v69 = vld [vmem:[%s1 + $0x8c] sm:$0xf]
    %v70 = vld [vmem:[%s1 + $0x90] sm:$0xf]
    %v71 = vld [vmem:[%s1 + $0x94] sm:$0xf]
    %v72 = vld [vmem:[%s1 + $0x98] sm:$0xf]
    %v73 = vld [vmem:[%s1 + $0x9c] sm:$0xf]
    %v74 = vld [vmem:[%s1 + $0xa0] sm:$0xf]
    %v75 = vld [vmem:[%s1 + $0xa4] sm:$0xf]
    %v76 = vld [vmem:[%s1 + $0xa8] sm:$0xf]
    %v77 = vld [vmem:[%s1 + $0xac] sm:$0xf]
    %v78 = vld [vmem:[%s1 + $0xb0] sm:$0xf]
    %v79 = vld [vmem:[%s1 + $0xb4] sm:$0xf]
    %v80 = vld [vmem:[%s1 + $0xb8] sm:$0xf]
    %v81 = vld [vmem:[%s1 + $0xbc] sm:$0xf]
    %v82 = vld [vmem:[%s1 + $0xc0] sm:$0xf]
    %v83 = vld [vmem:[%s1 + $0xc4] sm:$0xf]
    %v84 = vld [vmem:[%s1 + $0xc8] sm:$0xf]
    %v85 = vld [vmem:[%s1 + $0xcc] sm:$0xf]
    %v86 = vld [vmem:[%s1 + $0xd0] sm:$0xf]
    %v87 = vld [vmem:[%s1 + $0xd4] sm:$0xf]
    %v88 = vld [vmem:[%s1 + $0xd8] sm:$0xf]
    %v89 = vld [vmem:[%s1 + $0xdc] sm:$0xf]
    %v90 = vld [vmem:[%s1 + $0xe0] sm:$0xf]
    %v91 = vld [vmem:[%s1 + $0xe4] sm:$0xf]
    %v92 = vld [vmem:[%s1 + $0xe8] sm:$0xf]
    %v93 = vld [vmem:[%s1 + $0xec] sm:$0xf]
    %v94 = vld [vmem:[%s1 + $0xf0] sm:$0xf]
    %v95 = vld [vmem:[%s1 + $0xf4] sm:$0xf]
    %v96 = vld [vmem:[%s1 + $0xf8] sm:$0xf]
    %v97 = vld [vmem:[%s1 + $0xfc] sm:$0xf]
    %v98 = vld [vmem:[%s1 + $0x100] sm:$0xf]
    %v99 = vld [vmem:[%s1 + $0x104] sm:$0xf]
    %v100 = vld [vmem:[%s1 + $0x108] sm:$0xf]
    %v101 = vld [vmem:[%s1 + $0x10c] sm:$0xf]
    %v102 = vld [vmem:[%s1 + $0x110] sm:$0xf]
    %v103 = vld [vmem:[%s1 + $0x114] sm:$0xf]
    %v104 = vld [vmem:[%s1 + $0x118] sm:$0xf]
    %v105 = vld [vmem:[%s1 + $0x11c] sm:$0xf]
    %v106 = vld [vmem:[%s1 + $0x120] sm:$0xf]
    %v107 = vld [vmem:[%s1 + $0x124] sm:$0xf]
    %v108 = vld [vmem:[%s1 + $0x128] sm:$0xf]
    %v109 = vld [vmem:[%s1 + $0x12c] sm:$0xf]
    %v110 = vld [vmem:[%s1 + $0x130] sm:$0xf]
    %v111 = vld [vmem:[%s1 + $0x134] sm:$0xf]
    %v112 = vld [vmem:[%s1 + $0x138] sm:$0xf]
    %v113 = vld [vmem:[%s1 + $0x13c] sm:$0xf]
    %v114 = vld [vmem:[%s1 + $0x140] sm:$0xf]
    %v115 = vld [vmem:[%s1 + $0x144] sm:$0xf]
    %v116 = vld [vmem:[%s1 + $0x148] sm:$0xf]
    %v117 = vld [vmem:[%s1 + $0x14c] sm:$0xf]
    %v118 = vld [vmem:[%s1 + $0x150] sm:$0xf]
    %v119 = vld [vmem:[%s1 + $0x154] sm:$0xf]
    %v120 = vld [vmem:[%s1 + $0x158] sm:$0xf]
    %v121 = vld [vmem:[%s1 + $0x15c] sm:$0xf]
    %v122 = vld [vmem:[%s1 + $0x160] sm:$0xf]
    %v123 = vld [vmem:[%s1 + $0x164] sm:$0xf]
    %v124 = vld [vmem:[%s1 + $0x168] sm:$0xf]
    %v125 = vld [vmem:[%s1 + $0x16c] sm:$0xf]
    %v126 = vld [vmem:[%s1 + $0x170] sm:$0xf]
    %v127 = vld [vmem:[%s1 + $0x174] sm:$0xf]
    %v128 = vld [vmem:[%s1 + $0x178] sm:$0xf]
    %v129 = vld [vmem:[%s1 + $0x17c] sm:$0xf]
    %v130 = vld [vmem:[%s1 + $0x180] sm:$0xf]
    %v131 = vld [vmem:[%s1 + $0x184] sm:$0xf]
    %v132 = vld [vmem:[%s1 + $0x188] sm:$0xf]
    %v133 = vld [vmem:[%s1 + $0x18c] sm:$0xf]
    %v134 = vld [vmem:[%s1 + $0x190] sm:$0xf]
    %v135 = vld [vmem:[%s1 + $0x194] sm:$0xf]
    %v136 = vld [vmem:[%s1 + $0x198] sm:$0xf]
    %v137 = vld [vmem:[%s1 + $0x19c] sm:$0xf]
    %v138 = vld [vmem:[%s1 + $0x1a0] sm:$0xf]
    %v139 = vld [vmem:[%s1 + $0x1a4] sm:$0xf]
    %v140 = vld [vmem:[%s1 + $0x1a8] sm:$0xf]
    %v141 = vld [vmem:[%s1 + $0x1ac] sm:$0xf]
    %v142 = vld [vmem:[%s1 + $0x1b0] sm:$0xf]
    %v143 = vld [vmem:[%s1 + $0x1b4] sm:$0xf]
    %v144 = vld [vmem:[%s1 + $0x1b8] sm:$0xf]
    %v145 = vld [vmem:[%s1 + $0x1bc] sm:$0xf]
    %v146 = vld [vmem:[%s1 + $0x1c0] sm:$0xf]
    %v147 = vld [vmem:[%s1 + $0x1c4] sm:$0xf]
    %v148 = vld [vmem:[%s1 + $0x1c8] sm:$0xf]
    %v149 = vld [vmem:[%s1 + $0x1cc] sm:$0xf]
    %v150 = vld [vmem:[%s1 + $0x1d0] sm:$0xf]
    %v151 = vld [vmem:[%s1 + $0x1d4] sm:$0xf]
    %v152 = vld [vmem:[%s1 + $0x1d8] sm:$0xf]
    %v153 = vld [vmem:[%s1 + $0x1dc] sm:$0xf]
    %v154 = vld [vmem:[%s1 + $0x1e0] sm:$0xf]
    %v155 = vld [vmem:[%s1 + $0x1e4] sm:$0xf]
    %v156 = vld [vmem:[%s1 + $0x1e8] sm:$0xf]
    %v157 = vld [vmem:[%s1 + $0x1ec] sm:$0xf]
    %v158 = vld [vmem:[%s1 + $0x1f0] sm:$0xf]
    %v159 = vld [vmem:[%s1 + $0x1f4] sm:$0xf]
    %v160 = vld [vmem:[%s1 + $0x1f8] sm:$0xf]
    %v161 = vld [vmem:[%s1 + $0x1fc] sm:$0xf]
    %v162 = vld [vmem:[%s1 + $0x200] sm:$0xf]
    %v163 = vld [vmem:[%s1 + $0x204] sm:$0xf]
    %v164 = vld [vmem:[%s1 + $0x208] sm:$0xf]
    %v165 = vld [vmem:[%s1 + $0x20c] sm:$0xf]
    %v166 = vld [vmem:[%s1 + $0x210] sm:$0xf]
    %v167 = vld [vmem:[%s1 + $0x214] sm:$0xf]
    %v168 = vld [vmem:[%s1 + $0x218] sm:$0xf]
    %v169 = vld [vmem:[%s1 + $0x21c] sm:$0xf]
    %v170 = vld [vmem:[%s1 + $0x220] sm:$0xf]
    %v171 = vld [vmem:[%s1 + $0x224] sm:$0xf]
    %v172 = vld [vmem:[%s1 + $0x228] sm:$0xf]
    %v173 = vld [vmem:[%s1 + $0x22c] sm:$0xf]
    %v174 = vld [vmem:[%s1 + $0x230] sm:$0xf]
    %v175 = vld [vmem:[%s1 + $0x234] sm:$0xf]
    %v176 = vld [vmem:[%s1 + $0x238] sm:$0xf]
    %v177 = vld [vmem:[%s1 + $0x23c] sm:$0xf]
    %v178 = vld [vmem:[%s1 + $0x240] sm:$0xf]
    %v179 = vld [vmem:[%s1 + $0x244] sm:$0xf]
    %v180 = vld [vmem:[%s1 + $0x248] sm:$0xf]
    %v181 = vld [vmem:[%s1 + $0x24c] sm:$0xf]
    %v182 = vld [vmem:[%s1 + $0x250] sm:$0xf]
    %v183 = vld [vmem:[%s1 + $0x254] sm:$0xf]
    %v184 = vld [vmem:[%s1 + $0x258] sm:$0xf]
    %v185 = vld [vmem:[%s1 + $0x25c] sm:$0xf]
    %v186 = vld [vmem:[%s1 + $0x260] sm:$0xf]
    %v187 = vld [vmem:[%s1 + $0x264] sm:$0xf]
    %v188 = vld [vmem:[%s1 + $0x268] sm:$0xf]
    %v189 = vld [vmem:[%s1 + $0x26c] sm:$0xf]
    %v190 = vld [vmem:[%s1 + $0x270] sm:$0xf]
    %v191 = vld [vmem:[%s1 + $0x274] sm:$0xf]
    %v192 = vld [vmem:[%s1 + $0x278] sm:$0xf]
    %v193 = vld [vmem:[%s1 + $0x27c] sm:$0xf]
    %v194 = vld [vmem:[%s1 + $0x280] sm:$0xf]
    %v195 = vld [vmem:[%s1 + $0x284] sm:$0xf]
    %v196 = vld [vmem:[%s1 + $0x288] sm:$0xf]
    %v197 = vld [vmem:[%s1 + $0x28c] sm:$0xf]
    %v198 = vld [vmem:[%s1 + $0x290] sm:$0xf]
    %v199 = vld [vmem:[%s1 + $0x294] sm:$0xf]
    %v200 = vld [vmem:[%s1 + $0x298] sm:$0xf]
    %v201 = vld [vmem:[%s1 + $0x29c] sm:$0xf]
    %v202 = vld [vmem:[%s1 + $0x2a0] sm:$0xf]
    %v203 = vld [vmem:[%s1 + $0x2a4] sm:$0xf]
    %v204 = vld [vmem:[%s1 + $0x2a8] sm:$0xf]
    %v205 = vld [vmem:[%s1 + $0x2ac] sm:$0xf]
    %v206 = vld [vmem:[%s1 + $0x2b0] sm:$0xf]
    %v207 = vld [vmem:[%s1 + $0x2b4] sm:$0xf]
    %v208 = vld [vmem:[%s1 + $0x2b8] sm:$0xf]
    %v209 = vld [vmem:[%s1 + $0x2bc] sm:$0xf]
    %v210 = vld [vmem:[%s1 + $0x2c0] sm:$0xf]
    %v211 = vld [vmem:[%s1 + $0x2c4] sm:$0xf]
    %v212 = vld [vmem:[%s1 + $0x2c8] sm:$0xf]
    %v213 = vld [vmem:[%s1 + $0x2cc] sm:$0xf]
    %v214 = vld [vmem:[%s1 + $0x2d0] sm:$0xf]
    %v215 = vld [vmem:[%s1 + $0x2d4] sm:$0xf]
    %v216 = vld [vmem:[%s1 + $0x2d8] sm:$0xf]
    %v217 = vld [vmem:[%s1 + $0x2dc] sm:$0xf]
    %v218 = vld [vmem:[%s1 + $0x2e0] sm:$0xf]
    %v219 = vld [vmem:[%s1 + $0x2e4] sm:$0xf]
    %v220 = vld [vmem:[%s1 + $0x2e8] sm:$0xf]
    %v221 = vld [vmem:[%s1 + $0x2ec] sm:$0xf]
    %v222 = vld [vmem:[%s1 + $0x2f0] sm:$0xf]
    %v223 = vld [vmem:[%s1 + $0x2f4] sm:$0xf]
    %v224 = vld [vmem:[%s1 + $0x2f8] sm:$0xf]
    %v225 = vld [vmem:[%s1 + $0x2fc] sm:$0xf]
    %v226 = vld [vmem:[%s1 + $0x300] sm:$0xf]
    %v227 = vld [vmem:[%s1 + $0x304] sm:$0xf]
    %v228 = vld [vmem:[%s1 + $0x308] sm:$0xf]
    %v229 = vld [vmem:[%s1 + $0x30c] sm:$0xf]
    %v230 = vld [vmem:[%s1 + $0x310] sm:$0xf]
    %v231 = vld [vmem:[%s1 + $0x314] sm:$0xf]
    %v232 = vld [vmem:[%s1 + $0x318] sm:$0xf]
    %v233 = vld [vmem:[%s1 + $0x31c] sm:$0xf]
    %v234 = vld [vmem:[%s1 + $0x320] sm:$0xf]
    %v235 = vld [vmem:[%s1 + $0x324] sm:$0xf]
    %v236 = vld [vmem:[%s1 + $0x328] sm:$0xf]
    %v237 = vld [vmem:[%s1 + $0x32c] sm:$0xf]
    %v238 = vld [vmem:[%s1 + $0x330] sm:$0xf]
    %v239 = vld [vmem:[%s1 + $0x334] sm:$0xf]
    %v240 = vld [vmem:[%s1 + $0x338] sm:$0xf]
    %v241 = vld [vmem:[%s1 + $0x33c] sm:$0xf]
    %v242 = vld [vmem:[%s1 + $0x340] sm:$0xf]
    %v243 = vld [vmem:[%s1 + $0x344] sm:$0xf]
    %v244 = vld [vmem:[%s1 + $0x348] sm:$0xf]
    %v245 = vld [vmem:[%s1 + $0x34c] sm:$0xf]
    %v246 = vld [vmem:[%s1 + $0x350] sm:$0xf]
    %v247 = vld [vmem:[%s1 + $0x354] sm:$0xf]
    %v248 = vld [vmem:[%s1 + $0x358] sm:$0xf]
    %v249 = vld [vmem:[%s1 + $0x35c] sm:$0xf]
    %v250 = vld [vmem:[%s1 + $0x360] sm:$0xf]
    %v251 = vld [vmem:[%s1 + $0x364] sm:$0xf]
    %v252 = vld [vmem:[%s1 + $0x368] sm:$0xf]
    %v253 = vld [vmem:[%s1 + $0x36c] sm:$0xf]
    %v254 = vld [vmem:[%s1 + $0x370] sm:$0xf]
    %v255 = vld [vmem:[%s1 + $0x374] sm:$0xf]
    %v256 = vld [vmem:[%s1 + $0x378] sm:$0xf]
    %v257 = vld [vmem:[%s1 + $0x37c] sm:$0xf]
    %v258 = vld [vmem:[%s1 + $0x380] sm:$0xf]
    %v259 = vld [vmem:[%s1 + $0x384] sm:$0xf]
    %v260 = vld [vmem:[%s1 + $0x388] sm:$0xf]
    %v261 = vld [vmem:[%s1 + $0x38c] sm:$0xf]
    %v262 = vld [vmem:[%s1 + $0x390] sm:$0xf]
    %v263 = vld [vmem:[%s1 + $0x394] sm:$0xf]
    %v264 = vld [vmem:[%s1 + $0x398] sm:$0xf]
    %v265 = vld [vmem:[%s1 + $0x39c] sm:$0xf]
    %v266 = vld [vmem:[%s1 + $0x3a0] sm:$0xf]
    %v267 = vld [vmem:[%s1 + $0x3a4] sm:$0xf]
    %v268 = vld [vmem:[%s1 + $0x3a8] sm:$0xf]
    %v269 = vld [vmem:[%s1 + $0x3ac] sm:$0xf]
    %v270 = vld [vmem:[%s1 + $0x3b0] sm:$0xf]
    %v271 = vld [vmem:[%s1 + $0x3b4] sm:$0xf]
    %v272 = vld [vmem:[%s1 + $0x3b8] sm:$0xf]
    %v273 = vld [vmem:[%s1 + $0x3bc] sm:$0xf]
    %v274 = vld [vmem:[%s1 + $0x3c0] sm:$0xf]
    %v275 = vld [vmem:[%s1 + $0x3c4] sm:$0xf]
    %v276 = vld [vmem:[%s1 + $0x3c8] sm:$0xf]
    %v277 = vld [vmem:[%s1 + $0x3cc] sm:$0xf]
    %v278 = vld [vmem:[%s1 + $0x3d0] sm:$0xf]
    %v279 = vld [vmem:[%s1 + $0x3d4] sm:$0xf]
    %v280 = vld [vmem:[%s1 + $0x3d8] sm:$0xf]
    %v281 = vld [vmem:[%s1 + $0x3dc] sm:$0xf]
    %v282 = vld [vmem:[%s1 + $0x3e0] sm:$0xf]
    %v283 = vld [vmem:[%s1 + $0x3e4] sm:$0xf]
    %v284 = vld [vmem:[%s1 + $0x3e8] sm:$0xf]
    %v285 = vld [vmem:[%s1 + $0x3ec] sm:$0xf]
    %v286 = vld [vmem:[%s1 + $0x3f0] sm:$0xf]
    %v287 = vld [vmem:[%s1 + $0x3f4] sm:$0xf]
    %v288 = vld [vmem:[%s1 + $0x3f8] sm:$0xf]
    %v289 = vld [vmem:[%s1 + $0x3fc] sm:$0xf]
    %v290 = vld [vmem:[%s1 + $0x400] sm:$0xf]
    %v291 = vld [vmem:[%s1 + $0x404] sm:$0xf]
    %v292 = vld [vmem:[%s1 + $0x408] sm:$0xf]
    %v293 = vld [vmem:[%s1 + $0x40c] sm:$0xf]
    %v294 = vld [vmem:[%s1 + $0x410] sm:$0xf]
    %v295 = vld [vmem:[%s1 + $0x414] sm:$0xf]
    %v296 = vld [vmem:[%s1 + $0x418] sm:$0xf]
    %v297 = vld [vmem:[%s1 + $0x41c] sm:$0xf]
    %v298 = vld [vmem:[%s1 + $0x420] sm:$0xf]
    %v299 = vld [vmem:[%s1 + $0x424] sm:$0xf]
    %v300 = vld [vmem:[%s1 + $0x428] sm:$0xf]
    %v301 = vld [vmem:[%s1 + $0x42c] sm:$0xf]
    %v302 = vld [vmem:[%s1 + $0x430] sm:$0xf]
    %v303 = vld [vmem:[%s1 + $0x434] sm:$0xf]
    %v304 = vld [vmem:[%s1 + $0x438] sm:$0xf]
    %v305 = vld [vmem:[%s1 + $0x43c] sm:$0xf]
    %v306 = vld [vmem:[%s1 + $0x440] sm:$0xf]
    %v307 = vld [vmem:[%s1 + $0x444] sm:$0xf]
    %v308 = vld [vmem:[%s1 + $0x448] sm:$0xf]
    %v309 = vld [vmem:[%s1 + $0x44c] sm:$0xf]
    %v310 = vld [vmem:[%s1 + $0x450] sm:$0xf]
    %v311 = vld [vmem:[%s1 + $0x454] sm:$0xf]
    %v312 = vld [vmem:[%s1 + $0x458] sm:$0xf]
    %v313 = vld [vmem:[%s1 + $0x45c] sm:$0xf]
    %v314 = vld [vmem:[%s1 + $0x460] sm:$0xf]
    %v315 = vld [vmem:[%s1 + $0x464] sm:$0xf]
    %v316 = vld [vmem:[%s1 + $0x468] sm:$0xf]
    %v317 = vld [vmem:[%s1 + $0x46c] sm:$0xf]
    %v318 = vld [vmem:[%s1 + $0x470] sm:$0xf]
    %v319 = vld [vmem:[%s1 + $0x474] sm:$0xf]
    %v320 = vld [vmem:[%s1 + $0x478] sm:$0xf]
    %v321 = vld [vmem:[%s1 + $0x47c] sm:$0xf]
    %v322 = vld [vmem:[%s1 + $0x480] sm:$0xf]
    %v323 = vld [vmem:[%s1 + $0x484] sm:$0xf]
    %v324 = vld [vmem:[%s1 + $0x488] sm:$0xf]
    %v325 = vld [vmem:[%s1 + $0x48c] sm:$0xf]
    %v326 = vld [vmem:[%s1 + $0x490] sm:$0xf]
    %v327 = vld [vmem:[%s1 + $0x494] sm:$0xf]
    %v328 = vld [vmem:[%s1 + $0x498] sm:$0xf]
    %v329 = vld [vmem:[%s1 + $0x49c] sm:$0xf]
    %v330 = vld [vmem:[%s1 + $0x4a0] sm:$0xf]
    %v331 = vld [vmem:[%s1 + $0x4a4] sm:$0xf]
    %v332 = vld [vmem:[%s1 + $0x4a8] sm:$0xf]
    %v333 = vld [vmem:[%s1 + $0x4ac] sm:$0xf]
    %v334 = vld [vmem:[%s1 + $0x4b0] sm:$0xf]
    %v335 = vld [vmem:[%s1 + $0x4b4] sm:$0xf]
    %v336 = vld [vmem:[%s1 + $0x4b8] sm:$0xf]
    %v337 = vld [vmem:[%s1 + $0x4bc] sm:$0xf]
    %v338 = vld [vmem:[%s1 + $0x4c0] sm:$0xf]
    %v339 = vld [vmem:[%s1 + $0x4c4] sm:$0xf]
    %v340 = vld [vmem:[%s1 + $0x4c8] sm:$0xf]
    %v341 = vld [vmem:[%s1 + $0x4cc] sm:$0xf]
    %v342 = vld [vmem:[%s1 + $0x4d0] sm:$0xf]
    %v343 = vld [vmem:[%s1 + $0x4d4] sm:$0xf]
    %v344 = vld [vmem:[%s1 + $0x4d8] sm:$0xf]
    %v345 = vld [vmem:[%s1 + $0x4dc] sm:$0xf]
    %v346 = vld [vmem:[%s1 + $0x4e0] sm:$0xf]
    %v347 = vld [vmem:[%s1 + $0x4e4] sm:$0xf]
    %v348 = vld [vmem:[%s1 + $0x4e8] sm:$0xf]
    %v349 = vld [vmem:[%s1 + $0x4ec] sm:$0xf]
    %v350 = vld [vmem:[%s1 + $0x4f0] sm:$0xf]
    %v351 = vld [vmem:[%s1 + $0x4f4] sm:$0xf]
    %v352 = vld [vmem:[%s1 + $0x4f8] sm:$0xf]
    %v353 = vld [vmem:[%s1 + $0x4fc] sm:$0xf]
    %v354 = vld [vmem:[%s1 + $0x500] sm:$0xf]
    %v355 = vld [vmem:[%s1 + $0x504] sm:$0xf]
    %v356 = vld [vmem:[%s1 + $0x508] sm:$0xf]
    %v357 = vld [vmem:[%s1 + $0x50c] sm:$0xf]
    %v358 = vld [vmem:[%s1 + $0x510] sm:$0xf]
    %v359 = vld [vmem:[%s1 + $0x514] sm:$0xf]
    %v360 = vld [vmem:[%s1 + $0x518] sm:$0xf]
    %v361 = vld [vmem:[%s1 + $0x51c] sm:$0xf]
    %v362 = vld [vmem:[%s1 + $0x520] sm:$0xf]
    %v363 = vld [vmem:[%s1 + $0x524] sm:$0xf]
    %v364 = vld [vmem:[%s1 + $0x528] sm:$0xf]
    %v365 = vld [vmem:[%s1 + $0x52c] sm:$0xf]
    %v366 = vld [vmem:[%s1 + $0x530] sm:$0xf]
    %v367 = vld [vmem:[%s1 + $0x534] sm:$0xf]
    %v368 = vld [vmem:[%s1 + $0x538] sm:$0xf]
    %v369 = vld [vmem:[%s1 + $0x53c] sm:$0xf]
    %v370 = vld [vmem:[%s1 + $0x540] sm:$0xf]
    %v371 = vld [vmem:[%s1 + $0x544] sm:$0xf]
    %v372 = vld [vmem:[%s1 + $0x548] sm:$0xf]
    %v373 = vld [vmem:[%s1 + $0x54c] sm:$0xf]
    %v374 = vld [vmem:[%s1 + $0x550] sm:$0xf]
    %v375 = vld [vmem:[%s1 + $0x554] sm:$0xf]
    %v376 = vld [vmem:[%s1 + $0x558] sm:$0xf]
    %v377 = vld [vmem:[%s1 + $0x55c] sm:$0xf]
    %v378 = vld [vmem:[%s1 + $0x560] sm:$0xf]
    %v379 = vld [vmem:[%s1 + $0x564] sm:$0xf]
    %v380 = vld [vmem:[%s1 + $0x568] sm:$0xf]
    %v381 = vld [vmem:[%s1 + $0x56c] sm:$0xf]
    %v382 = vld [vmem:[%s1 + $0x570] sm:$0xf]
    %v383 = vld [vmem:[%s1 + $0x574] sm:$0xf]
    %v384 = vld [vmem:[%s1 + $0x578] sm:$0xf]
    %v385 = vld [vmem:[%s1 + $0x57c] sm:$0xf]
    %v386 = vld [vmem:[%s1 + $0x580] sm:$0xf]
    %v387 = vld [vmem:[%s1 + $0x584] sm:$0xf]
    %v388 = vld [vmem:[%s1 + $0x588] sm:$0xf]
    %v389 = vld [vmem:[%s1 + $0x58c] sm:$0xf]
    %v390 = vld [vmem:[%s1 + $0x590] sm:$0xf]
    %v391 = vld [vmem:[%s1 + $0x594] sm:$0xf]
    %v392 = vld [vmem:[%s1 + $0x598] sm:$0xf]
    %v393 = vld [vmem:[%s1 + $0x59c] sm:$0xf]
    %v394 = vld [vmem:[%s1 + $0x5a0] sm:$0xf]
    %v395 = vld [vmem:[%s1 + $0x5a4] sm:$0xf]
    %v396 = vld [vmem:[%s1 + $0x5a8] sm:$0xf]
    %v397 = vld [vmem:[%s1 + $0x5ac] sm:$0xf]
    %v398 = vld [vmem:[%s1 + $0x5b0] sm:$0xf]
    %v399 = vld [vmem:[%s1 + $0x5b4] sm:$0xf]
    %v400 = vld [vmem:[%s1 + $0x5b8] sm:$0xf]
    %v401 = vld [vmem:[%s1 + $0x5bc] sm:$0xf]
    %v402 = vld [vmem:[%s1 + $0x5c0] sm:$0xf]
    %v403 = vld [vmem:[%s1 + $0x5c4] sm:$0xf]
    %v404 = vld [vmem:[%s1 + $0x5c8] sm:$0xf]
    %v405 = vld [vmem:[%s1 + $0x5cc] sm:$0xf]
    %v406 = vld [vmem:[%s1 + $0x5d0] sm:$0xf]
    %v407 = vld [vmem:[%s1 + $0x5d4] sm:$0xf]
    %v408 = vld [vmem:[%s1 + $0x5d8] sm:$0xf]
    %v409 = vld [vmem:[%s1 + $0x5dc] sm:$0xf]
    %v410 = vld [vmem:[%s1 + $0x5e0] sm:$0xf]
    %v411 = vld [vmem:[%s1 + $0x5e4] sm:$0xf]
    %v412 = vld [vmem:[%s1 + $0x5e8] sm:$0xf]
    %v413 = vld [vmem:[%s1 + $0x5ec] sm:$0xf]
    %v414 = vld [vmem:[%s1 + $0x5f0] sm:$0xf]
    %v415 = vld [vmem:[%s1 + $0x5f4] sm:$0xf]
    %v416 = vld [vmem:[%s1 + $0x5f8] sm:$0xf]
    %v417 = vld [vmem:[%s1 + $0x5fc] sm:$0xf]
    %v418 = vld [vmem:[%s2] sm:$0x1]
    %v420 = vlaneseq
    %v421 = vshrl.u32 %v420, 7
    %v422 = vsub.s32 0, %v421
    %v423 = vrot.slane %v418, %v422
    %v437 = vunpack.c.l.b16 %v22
    %v438 = vunpack.c.h.b16 %v22
    %v439 = vunpack.c.l.b16 %v23
    %v440 = vunpack.c.h.b16 %v23
    %v441 = vunpack.c.l.b16 %v24
    %v442 = vunpack.c.h.b16 %v24
    %v443 = vunpack.c.l.b16 %v25
    %v444 = vunpack.c.h.b16 %v25
    %v445 = vunpack.c.l.b16 %v26
    %v446 = vunpack.c.h.b16 %v26
    %v447 = vunpack.c.l.b16 %v27
    %v448 = vunpack.c.h.b16 %v27
    %v449 = vunpack.c.l.b16 %v28
    %v450 = vunpack.c.h.b16 %v28
    %v451 = vunpack.c.l.b16 %v29
    %v452 = vunpack.c.h.b16 %v29
    %v453 = vunpack.c.l.b16 %v30
    %v454 = vunpack.c.h.b16 %v30
    %v455 = vunpack.c.l.b16 %v31
    %v456 = vunpack.c.h.b16 %v31
    %v457 = vunpack.c.l.b16 %v32
    %v458 = vunpack.c.h.b16 %v32
    %v459 = vunpack.c.l.b16 %v33
    %v460 = vunpack.c.h.b16 %v33
    %v461 = vpack.c.b16 %v437, %v437
    %v462 = vpack.c.b16 %v438, %v438
    %v463 = vpack.c.b16 %v439, %v439
    %v464 = vpack.c.b16 %v440, %v440
    %v465 = vpack.c.b16 %v441, %v441
    %v466 = vpack.c.b16 %v442, %v442
    %v467 = vpack.c.b16 %v443, %v443
    %v468 = vpack.c.b16 %v444, %v444
    %v469 = vpack.c.b16 %v445, %v445
    %v470 = vpack.c.b16 %v446, %v446
    %v471 = vpack.c.b16 %v447, %v447
    %v472 = vpack.c.b16 %v448, %v448
    %v473 = vpack.c.b16 %v449, %v449
    %v474 = vpack.c.b16 %v450, %v450
    %v475 = vpack.c.b16 %v451, %v451
    %v476 = vpack.c.b16 %v452, %v452
    %v477 = vpack.c.b16 %v453, %v453
    %v478 = vpack.c.b16 %v454, %v454
    %v479 = vpack.c.b16 %v455, %v455
    %v480 = vpack.c.b16 %v456, %v456
    %v481 = vpack.c.b16 %v457, %v457
    %v482 = vpack.c.b16 %v458, %v458
    %v483 = vpack.c.b16 %v459, %v459
    %v484 = vpack.c.b16 %v460, %v460
    %v893 = vunpack.c.l.b16 %v34
    %v894 = vunpack.c.l.b16 %v35
    %v895 = vunpack.c.l.b16 %v36
    %v896 = vunpack.c.l.b16 %v37
    %v897 = vunpack.c.l.b16 %v38
    %v898 = vunpack.c.l.b16 %v39
    %v899 = vunpack.c.l.b16 %v40
    %v900 = vunpack.c.l.b16 %v41
    %v901 = vunpack.c.l.b16 %v42
    %v902 = vunpack.c.l.b16 %v43
    %v903 = vunpack.c.l.b16 %v44
    %v904 = vunpack.c.l.b16 %v45
    %v905 = vunpack.c.l.b16 %v46
    %v906 = vunpack.c.l.b16 %v47
    %v907 = vunpack.c.l.b16 %v48
    %v908 = vunpack.c.l.b16 %v49
    %v909 = vunpack.c.l.b16 %v50
    %v910 = vunpack.c.l.b16 %v51
    %v911 = vunpack.c.l.b16 %v52
    %v912 = vunpack.c.l.b16 %v53
    %v913 = vunpack.c.l.b16 %v54
    %v914 = vunpack.c.l.b16 %v55
    %v915 = vunpack.c.l.b16 %v56
    %v916 = vunpack.c.l.b16 %v57
    %v917 = vunpack.c.l.b16 %v58
    %v918 = vunpack.c.l.b16 %v59
    %v919 = vunpack.c.l.b16 %v60
    %v920 = vunpack.c.l.b16 %v61
    %v921 = vunpack.c.l.b16 %v62
    %v922 = vunpack.c.l.b16 %v63
    %v923 = vunpack.c.l.b16 %v64
    %v924 = vunpack.c.l.b16 %v65
    %v925 = vunpack.c.l.b16 %v66
    %v926 = vunpack.c.l.b16 %v67
    %v927 = vunpack.c.l.b16 %v68
    %v928 = vunpack.c.l.b16 %v69
    %v929 = vunpack.c.l.b16 %v70
    %v930 = vunpack.c.l.b16 %v71
    %v931 = vunpack.c.l.b16 %v72
    %v932 = vunpack.c.l.b16 %v73
    %v933 = vunpack.c.l.b16 %v74
    %v934 = vunpack.c.l.b16 %v75
    %v935 = vunpack.c.l.b16 %v76
    %v936 = vunpack.c.l.b16 %v77
    %v937 = vunpack.c.l.b16 %v78
    %v938 = vunpack.c.l.b16 %v79
    %v939 = vunpack.c.l.b16 %v80
    %v940 = vunpack.c.l.b16 %v81
    %v941 = vunpack.c.l.b16 %v82
    %v942 = vunpack.c.l.b16 %v83
    %v943 = vunpack.c.l.b16 %v84
    %v944 = vunpack.c.l.b16 %v85
    %v945 = vunpack.c.l.b16 %v86
    %v946 = vunpack.c.l.b16 %v87
    %v947 = vunpack.c.l.b16 %v88
    %v948 = vunpack.c.l.b16 %v89
    %v949 = vunpack.c.l.b16 %v90
    %v950 = vunpack.c.l.b16 %v91
    %v951 = vunpack.c.l.b16 %v92
    %v952 = vunpack.c.l.b16 %v93
    %v953 = vunpack.c.l.b16 %v94
    %v954 = vunpack.c.l.b16 %v95
    %v955 = vunpack.c.l.b16 %v96
    %v956 = vunpack.c.l.b16 %v97
    %v957 = vunpack.c.l.b16 %v98
    %v958 = vunpack.c.l.b16 %v99
    %v959 = vunpack.c.l.b16 %v100
    %v960 = vunpack.c.l.b16 %v101
    %v961 = vunpack.c.l.b16 %v102
    %v962 = vunpack.c.l.b16 %v103
    %v963 = vunpack.c.l.b16 %v104
    %v964 = vunpack.c.l.b16 %v105
    %v965 = vunpack.c.l.b16 %v106
    %v966 = vunpack.c.l.b16 %v107
    %v967 = vunpack.c.l.b16 %v108
    %v968 = vunpack.c.l.b16 %v109
    %v969 = vunpack.c.l.b16 %v110
    %v970 = vunpack.c.l.b16 %v111
    %v971 = vunpack.c.l.b16 %v112
    %v972 = vunpack.c.l.b16 %v113
    %v973 = vunpack.c.l.b16 %v114
    %v974 = vunpack.c.l.b16 %v115
    %v975 = vunpack.c.l.b16 %v116
    %v976 = vunpack.c.l.b16 %v117
    %v977 = vunpack.c.l.b16 %v118
    %v978 = vunpack.c.l.b16 %v119
    %v979 = vunpack.c.l.b16 %v120
    %v980 = vunpack.c.l.b16 %v121
    %v981 = vunpack.c.l.b16 %v122
    %v982 = vunpack.c.l.b16 %v123
    %v983 = vunpack.c.l.b16 %v124
    %v984 = vunpack.c.l.b16 %v125
    %v985 = vunpack.c.l.b16 %v126
    %v986 = vunpack.c.l.b16 %v127
    %v987 = vunpack.c.l.b16 %v128
    %v988 = vunpack.c.l.b16 %v129
    %v989 = vunpack.c.l.b16 %v130
    %v990 = vunpack.c.l.b16 %v131
    %v991 = vunpack.c.l.b16 %v132
    %v992 = vunpack.c.l.b16 %v133
    %v993 = vunpack.c.l.b16 %v134
    %v994 = vunpack.c.l.b16 %v135
    %v995 = vunpack.c.l.b16 %v136
    %v996 = vunpack.c.l.b16 %v137
    %v997 = vunpack.c.l.b16 %v138
    %v998 = vunpack.c.l.b16 %v139
    %v999 = vunpack.c.l.b16 %v140
    %v1000 = vunpack.c.l.b16 %v141
    %v1001 = vunpack.c.l.b16 %v142
    %v1002 = vunpack.c.l.b16 %v143
    %v1003 = vunpack.c.l.b16 %v144
    %v1004 = vunpack.c.l.b16 %v145
    %v1005 = vunpack.c.l.b16 %v146
    %v1006 = vunpack.c.l.b16 %v147
    %v1007 = vunpack.c.l.b16 %v148
    %v1008 = vunpack.c.l.b16 %v149
    %v1009 = vunpack.c.l.b16 %v150
    %v1010 = vunpack.c.l.b16 %v151
    %v1011 = vunpack.c.l.b16 %v152
    %v1012 = vunpack.c.l.b16 %v153
    %v1013 = vunpack.c.l.b16 %v154
    %v1014 = vunpack.c.l.b16 %v155
    %v1015 = vunpack.c.l.b16 %v156
    %v1016 = vunpack.c.l.b16 %v157
    %v1017 = vunpack.c.l.b16 %v158
    %v1018 = vunpack.c.l.b16 %v159
    %v1019 = vunpack.c.l.b16 %v160
    %v1020 = vunpack.c.l.b16 %v161
    %v1021 = vunpack.c.l.b16 %v162
    %v1022 = vunpack.c.l.b16 %v163
    %v1023 = vunpack.c.l.b16 %v164
    %v1024 = vunpack.c.l.b16 %v165
    %v1025 = vunpack.c.l.b16 %v166
    %v1026 = vunpack.c.l.b16 %v167
    %v1027 = vunpack.c.l.b16 %v168
    %v1028 = vunpack.c.l.b16 %v169
    %v1029 = vunpack.c.l.b16 %v170
    %v1030 = vunpack.c.l.b16 %v171
    %v1031 = vunpack.c.l.b16 %v172
    %v1032 = vunpack.c.l.b16 %v173
    %v1033 = vunpack.c.l.b16 %v174
    %v1034 = vunpack.c.l.b16 %v175
    %v1035 = vunpack.c.l.b16 %v176
    %v1036 = vunpack.c.l.b16 %v177
    %v1037 = vunpack.c.l.b16 %v178
    %v1038 = vunpack.c.l.b16 %v179
    %v1039 = vunpack.c.l.b16 %v180
    %v1040 = vunpack.c.l.b16 %v181
    %v1041 = vunpack.c.l.b16 %v182
    %v1042 = vunpack.c.l.b16 %v183
    %v1043 = vunpack.c.l.b16 %v184
    %v1044 = vunpack.c.l.b16 %v185
    %v1045 = vunpack.c.l.b16 %v186
    %v1046 = vunpack.c.l.b16 %v187
    %v1047 = vunpack.c.l.b16 %v188
    %v1048 = vunpack.c.l.b16 %v189
    %v1049 = vunpack.c.l.b16 %v190
    %v1050 = vunpack.c.l.b16 %v191
    %v1051 = vunpack.c.l.b16 %v192
    %v1052 = vunpack.c.l.b16 %v193
    %v1053 = vunpack.c.l.b16 %v194
    %v1054 = vunpack.c.l.b16 %v195
    %v1055 = vunpack.c.l.b16 %v196
    %v1056 = vunpack.c.l.b16 %v197
    %v1057 = vunpack.c.l.b16 %v198
    %v1058 = vunpack.c.l.b16 %v199
    %v1059 = vunpack.c.l.b16 %v200
    %v1060 = vunpack.c.l.b16 %v201
    %v1061 = vunpack.c.l.b16 %v202
    %v1062 = vunpack.c.l.b16 %v203
    %v1063 = vunpack.c.l.b16 %v204
    %v1064 = vunpack.c.l.b16 %v205
    %v1065 = vunpack.c.l.b16 %v206
    %v1066 = vunpack.c.l.b16 %v207
    %v1067 = vunpack.c.l.b16 %v208
    %v1068 = vunpack.c.l.b16 %v209
    %v1069 = vunpack.c.l.b16 %v210
    %v1070 = vunpack.c.l.b16 %v211
    %v1071 = vunpack.c.l.b16 %v212
    %v1072 = vunpack.c.l.b16 %v213
    %v1073 = vunpack.c.l.b16 %v214
    %v1074 = vunpack.c.l.b16 %v215
    %v1075 = vunpack.c.l.b16 %v216
    %v1076 = vunpack.c.l.b16 %v217
    %v1077 = vunpack.c.l.b16 %v218
    %v1078 = vunpack.c.l.b16 %v219
    %v1079 = vunpack.c.l.b16 %v220
    %v1080 = vunpack.c.l.b16 %v221
    %v1081 = vunpack.c.l.b16 %v222
    %v1082 = vunpack.c.l.b16 %v223
    %v1083 = vunpack.c.l.b16 %v224
    %v1084 = vunpack.c.l.b16 %v225
    %v1085 = vunpack.c.l.b16 %v226
    %v1086 = vunpack.c.l.b16 %v227
    %v1087 = vunpack.c.l.b16 %v228
    %v1088 = vunpack.c.l.b16 %v229
    %v1089 = vunpack.c.l.b16 %v230
    %v1090 = vunpack.c.l.b16 %v231
    %v1091 = vunpack.c.l.b16 %v232
    %v1092 = vunpack.c.l.b16 %v233
    %v1093 = vunpack.c.l.b16 %v234
    %v1094 = vunpack.c.l.b16 %v235
    %v1095 = vunpack.c.l.b16 %v236
    %v1096 = vunpack.c.l.b16 %v237
    %v1097 = vunpack.c.l.b16 %v238
    %v1098 = vunpack.c.l.b16 %v239
    %v1099 = vunpack.c.l.b16 %v240
    %v1100 = vunpack.c.l.b16 %v241
    %v1101 = vunpack.c.l.b16 %v242
    %v1102 = vunpack.c.l.b16 %v243
    %v1103 = vunpack.c.l.b16 %v244
    %v1104 = vunpack.c.l.b16 %v245
    %v1105 = vunpack.c.l.b16 %v246
    %v1106 = vunpack.c.l.b16 %v247
    %v1107 = vunpack.c.l.b16 %v248
    %v1108 = vunpack.c.l.b16 %v249
    %v1109 = vunpack.c.l.b16 %v250
    %v1110 = vunpack.c.l.b16 %v251
    %v1111 = vunpack.c.l.b16 %v252
    %v1112 = vunpack.c.l.b16 %v253
    %v1113 = vunpack.c.l.b16 %v254
    %v1114 = vunpack.c.l.b16 %v255
    %v1115 = vunpack.c.l.b16 %v256
    %v1116 = vunpack.c.l.b16 %v257
    %v1117 = vunpack.c.l.b16 %v258
    %v1118 = vunpack.c.l.b16 %v259
    %v1119 = vunpack.c.l.b16 %v260
    %v1120 = vunpack.c.l.b16 %v261
    %v1121 = vunpack.c.l.b16 %v262
    %v1122 = vunpack.c.l.b16 %v263
    %v1123 = vunpack.c.l.b16 %v264
    %v1124 = vunpack.c.l.b16 %v265
    %v1125 = vunpack.c.l.b16 %v266
    %v1126 = vunpack.c.l.b16 %v267
    %v1127 = vunpack.c.l.b16 %v268
    %v1128 = vunpack.c.l.b16 %v269
    %v1129 = vunpack.c.l.b16 %v270
    %v1130 = vunpack.c.l.b16 %v271
    %v1131 = vunpack.c.l.b16 %v272
    %v1132 = vunpack.c.l.b16 %v273
    %v1133 = vunpack.c.l.b16 %v274
    %v1134 = vunpack.c.l.b16 %v275
    %v1135 = vunpack.c.l.b16 %v276
    %v1136 = vunpack.c.l.b16 %v277
    %v1137 = vunpack.c.l.b16 %v278
    %v1138 = vunpack.c.l.b16 %v279
    %v1139 = vunpack.c.l.b16 %v280
    %v1140 = vunpack.c.l.b16 %v281
    %v1141 = vunpack.c.l.b16 %v282
    %v1142 = vunpack.c.l.b16 %v283
    %v1143 = vunpack.c.l.b16 %v284
    %v1144 = vunpack.c.l.b16 %v285
    %v1145 = vunpack.c.l.b16 %v286
    %v1146 = vunpack.c.l.b16 %v287
    %v1147 = vunpack.c.l.b16 %v288
    %v1148 = vunpack.c.l.b16 %v289
    %v1149 = vunpack.c.l.b16 %v290
    %v1150 = vunpack.c.l.b16 %v291
    %v1151 = vunpack.c.l.b16 %v292
    %v1152 = vunpack.c.l.b16 %v293
    %v1153 = vunpack.c.l.b16 %v294
    %v1154 = vunpack.c.l.b16 %v295
    %v1155 = vunpack.c.l.b16 %v296
    %v1156 = vunpack.c.l.b16 %v297
    %v1157 = vunpack.c.l.b16 %v298
    %v1158 = vunpack.c.l.b16 %v299
    %v1159 = vunpack.c.l.b16 %v300
    %v1160 = vunpack.c.l.b16 %v301
    %v1161 = vunpack.c.l.b16 %v302
    %v1162 = vunpack.c.l.b16 %v303
    %v1163 = vunpack.c.l.b16 %v304
    %v1164 = vunpack.c.l.b16 %v305
    %v1165 = vunpack.c.l.b16 %v306
    %v1166 = vunpack.c.l.b16 %v307
    %v1167 = vunpack.c.l.b16 %v308
    %v1168 = vunpack.c.l.b16 %v309
    %v1169 = vunpack.c.l.b16 %v310
    %v1170 = vunpack.c.l.b16 %v311
    %v1171 = vunpack.c.l.b16 %v312
    %v1172 = vunpack.c.l.b16 %v313
    %v1173 = vunpack.c.l.b16 %v314
    %v1174 = vunpack.c.l.b16 %v315
    %v1175 = vunpack.c.l.b16 %v316
    %v1176 = vunpack.c.l.b16 %v317
    %v1177 = vunpack.c.l.b16 %v318
    %v1178 = vunpack.c.l.b16 %v319
    %v1179 = vunpack.c.l.b16 %v320
    %v1180 = vunpack.c.l.b16 %v321
    %v1181 = vunpack.c.l.b16 %v322
    %v1182 = vunpack.c.l.b16 %v323
    %v1183 = vunpack.c.l.b16 %v324
    %v1184 = vunpack.c.l.b16 %v325
    %v1185 = vunpack.c.l.b16 %v326
    %v1186 = vunpack.c.l.b16 %v327
    %v1187 = vunpack.c.l.b16 %v328
    %v1188 = vunpack.c.l.b16 %v329
    %v1189 = vunpack.c.l.b16 %v330
    %v1190 = vunpack.c.l.b16 %v331
    %v1191 = vunpack.c.l.b16 %v332
    %v1192 = vunpack.c.l.b16 %v333
    %v1193 = vunpack.c.l.b16 %v334
    %v1194 = vunpack.c.l.b16 %v335
    %v1195 = vunpack.c.l.b16 %v336
    %v1196 = vunpack.c.l.b16 %v337
    %v1197 = vunpack.c.l.b16 %v338
    %v1198 = vunpack.c.l.b16 %v339
    %v1199 = vunpack.c.l.b16 %v340
    %v1200 = vunpack.c.l.b16 %v341
    %v1201 = vunpack.c.l.b16 %v342
    %v1202 = vunpack.c.l.b16 %v343
    %v1203 = vunpack.c.l.b16 %v344
    %v1204 = vunpack.c.l.b16 %v345
    %v1205 = vunpack.c.l.b16 %v346
    %v1206 = vunpack.c.l.b16 %v347
    %v1207 = vunpack.c.l.b16 %v348
    %v1208 = vunpack.c.l.b16 %v349
    %v1209 = vunpack.c.l.b16 %v350
    %v1210 = vunpack.c.l.b16 %v351
    %v1211 = vunpack.c.l.b16 %v352
    %v1212 = vunpack.c.l.b16 %v353
    %v1213 = vunpack.c.l.b16 %v354
    %v1214 = vunpack.c.l.b16 %v355
    %v1215 = vunpack.c.l.b16 %v356
    %v1216 = vunpack.c.l.b16 %v357
    %v1217 = vunpack.c.l.b16 %v358
    %v1218 = vunpack.c.l.b16 %v359
    %v1219 = vunpack.c.l.b16 %v360
    %v1220 = vunpack.c.l.b16 %v361
    %v1221 = vunpack.c.l.b16 %v362
    %v1222 = vunpack.c.l.b16 %v363
    %v1223 = vunpack.c.l.b16 %v364
    %v1224 = vunpack.c.l.b16 %v365
    %v1225 = vunpack.c.l.b16 %v366
    %v1226 = vunpack.c.l.b16 %v367
    %v1227 = vunpack.c.l.b16 %v368
    %v1228 = vunpack.c.l.b16 %v369
    %v1229 = vunpack.c.l.b16 %v370
    %v1230 = vunpack.c.l.b16 %v371
    %v1231 = vunpack.c.l.b16 %v372
    %v1232 = vunpack.c.l.b16 %v373
    %v1233 = vunpack.c.l.b16 %v374
    %v1234 = vunpack.c.l.b16 %v375
    %v1235 = vunpack.c.l.b16 %v376
    %v1236 = vunpack.c.l.b16 %v377
    %v1237 = vunpack.c.l.b16 %v378
    %v1238 = vunpack.c.l.b16 %v379
    %v1239 = vunpack.c.l.b16 %v380
    %v1240 = vunpack.c.l.b16 %v381
    %v1241 = vunpack.c.l.b16 %v382
    %v1242 = vunpack.c.l.b16 %v383
    %v1243 = vunpack.c.l.b16 %v384
    %v1244 = vunpack.c.l.b16 %v385
    %v1245 = vunpack.c.l.b16 %v386
    %v1246 = vunpack.c.l.b16 %v387
    %v1247 = vunpack.c.l.b16 %v388
    %v1248 = vunpack.c.l.b16 %v389
    %v1249 = vunpack.c.l.b16 %v390
    %v1250 = vunpack.c.l.b16 %v391
    %v1251 = vunpack.c.l.b16 %v392
    %v1252 = vunpack.c.l.b16 %v393
    %v1253 = vunpack.c.l.b16 %v394
    %v1254 = vunpack.c.l.b16 %v395
    %v1255 = vunpack.c.l.b16 %v396
    %v1256 = vunpack.c.l.b16 %v397
    %v1257 = vunpack.c.l.b16 %v398
    %v1258 = vunpack.c.l.b16 %v399
    %v1259 = vunpack.c.l.b16 %v400
    %v1260 = vunpack.c.l.b16 %v401
    %v1261 = vunpack.c.l.b16 %v402
    %v1262 = vunpack.c.l.b16 %v403
    %v1263 = vunpack.c.l.b16 %v404
    %v1264 = vunpack.c.l.b16 %v405
    %v1265 = vunpack.c.l.b16 %v406
    %v1266 = vunpack.c.l.b16 %v407
    %v1267 = vunpack.c.l.b16 %v408
    %v1268 = vunpack.c.l.b16 %v409
    %v1269 = vunpack.c.l.b16 %v410
    %v1270 = vunpack.c.l.b16 %v411
    %v1271 = vunpack.c.l.b16 %v412
    %v1272 = vunpack.c.l.b16 %v413
    %v1273 = vunpack.c.l.b16 %v414
    %v1274 = vunpack.c.l.b16 %v415
    %v1275 = vunpack.c.l.b16 %v416
    %v1276 = vunpack.c.l.b16 %v417
    %v1277 = vpack.c.b16 %v894, %v893
    %v1278 = vpack.c.b16 %v896, %v895
    %v1279 = vpack.c.b16 %v898, %v897
    %v1280 = vpack.c.b16 %v900, %v899
    %v1281 = vpack.c.b16 %v902, %v901
    %v1282 = vpack.c.b16 %v904, %v903
    %v1283 = vpack.c.b16 %v906, %v905
    %v1284 = vpack.c.b16 %v908, %v907
    %v1285 = vpack.c.b16 %v910, %v909
    %v1286 = vpack.c.b16 %v912, %v911
    %v1287 = vpack.c.b16 %v914, %v913
    %v1288 = vpack.c.b16 %v916, %v915
    %v1289 = vpack.c.b16 %v918, %v917
    %v1290 = vpack.c.b16 %v920, %v919
    %v1291 = vpack.c.b16 %v922, %v921
    %v1292 = vpack.c.b16 %v924, %v923
    %v1293 = vpack.c.b16 %v926, %v925
    %v1294 = vpack.c.b16 %v928, %v927
    %v1295 = vpack.c.b16 %v930, %v929
    %v1296 = vpack.c.b16 %v932, %v931
    %v1297 = vpack.c.b16 %v934, %v933
    %v1298 = vpack.c.b16 %v936, %v935
    %v1299 = vpack.c.b16 %v938, %v937
    %v1300 = vpack.c.b16 %v940, %v939
    %v1301 = vpack.c.b16 %v942, %v941
    %v1302 = vpack.c.b16 %v944, %v943
    %v1303 = vpack.c.b16 %v946, %v945
    %v1304 = vpack.c.b16 %v948, %v947
    %v1305 = vpack.c.b16 %v950, %v949
    %v1306 = vpack.c.b16 %v952, %v951
    %v1307 = vpack.c.b16 %v954, %v953
    %v1308 = vpack.c.b16 %v956, %v955
    %v1309 = vpack.c.b16 %v958, %v957
    %v1310 = vpack.c.b16 %v960, %v959
    %v1311 = vpack.c.b16 %v962, %v961
    %v1312 = vpack.c.b16 %v964, %v963
    %v1313 = vpack.c.b16 %v966, %v965
    %v1314 = vpack.c.b16 %v968, %v967
    %v1315 = vpack.c.b16 %v970, %v969
    %v1316 = vpack.c.b16 %v972, %v971
    %v1317 = vpack.c.b16 %v974, %v973
    %v1318 = vpack.c.b16 %v976, %v975
    %v1319 = vpack.c.b16 %v978, %v977
    %v1320 = vpack.c.b16 %v980, %v979
    %v1321 = vpack.c.b16 %v982, %v981
    %v1322 = vpack.c.b16 %v984, %v983
    %v1323 = vpack.c.b16 %v986, %v985
    %v1324 = vpack.c.b16 %v988, %v987
    %v1325 = vpack.c.b16 %v990, %v989
    %v1326 = vpack.c.b16 %v992, %v991
    %v1327 = vpack.c.b16 %v994, %v993
    %v1328 = vpack.c.b16 %v996, %v995
    %v1329 = vpack.c.b16 %v998, %v997
    %v1330 = vpack.c.b16 %v1000, %v999
    %v1331 = vpack.c.b16 %v1002, %v1001
    %v1332 = vpack.c.b16 %v1004, %v1003
    %v1333 = vpack.c.b16 %v1006, %v1005
    %v1334 = vpack.c.b16 %v1008, %v1007
    %v1335 = vpack.c.b16 %v1010, %v1009
    %v1336 = vpack.c.b16 %v1012, %v1011
    %v1337 = vpack.c.b16 %v1014, %v1013
    %v1338 = vpack.c.b16 %v1016, %v1015
    %v1339 = vpack.c.b16 %v1018, %v1017
    %v1340 = vpack.c.b16 %v1020, %v1019
    %v1341 = vpack.c.b16 %v1022, %v1021
    %v1342 = vpack.c.b16 %v1024, %v1023
    %v1343 = vpack.c.b16 %v1026, %v1025
    %v1344 = vpack.c.b16 %v1028, %v1027
    %v1345 = vpack.c.b16 %v1030, %v1029
    %v1346 = vpack.c.b16 %v1032, %v1031
    %v1347 = vpack.c.b16 %v1034, %v1033
    %v1348 = vpack.c.b16 %v1036, %v1035
    %v1349 = vpack.c.b16 %v1038, %v1037
    %v1350 = vpack.c.b16 %v1040, %v1039
    %v1351 = vpack.c.b16 %v1042, %v1041
    %v1352 = vpack.c.b16 %v1044, %v1043
    %v1353 = vpack.c.b16 %v1046, %v1045
    %v1354 = vpack.c.b16 %v1048, %v1047
    %v1355 = vpack.c.b16 %v1050, %v1049
    %v1356 = vpack.c.b16 %v1052, %v1051
    %v1357 = vpack.c.b16 %v1054, %v1053
    %v1358 = vpack.c.b16 %v1056, %v1055
    %v1359 = vpack.c.b16 %v1058, %v1057
    %v1360 = vpack.c.b16 %v1060, %v1059
    %v1361 = vpack.c.b16 %v1062, %v1061
    %v1362 = vpack.c.b16 %v1064, %v1063
    %v1363 = vpack.c.b16 %v1066, %v1065
    %v1364 = vpack.c.b16 %v1068, %v1067
    %v1365 = vpack.c.b16 %v1070, %v1069
    %v1366 = vpack.c.b16 %v1072, %v1071
    %v1367 = vpack.c.b16 %v1074, %v1073
    %v1368 = vpack.c.b16 %v1076, %v1075
    %v1369 = vpack.c.b16 %v1078, %v1077
    %v1370 = vpack.c.b16 %v1080, %v1079
    %v1371 = vpack.c.b16 %v1082, %v1081
    %v1372 = vpack.c.b16 %v1084, %v1083
    %v1373 = vpack.c.b16 %v1086, %v1085
    %v1374 = vpack.c.b16 %v1088, %v1087
    %v1375 = vpack.c.b16 %v1090, %v1089
    %v1376 = vpack.c.b16 %v1092, %v1091
    %v1377 = vpack.c.b16 %v1094, %v1093
    %v1378 = vpack.c.b16 %v1096, %v1095
    %v1379 = vpack.c.b16 %v1098, %v1097
    %v1380 = vpack.c.b16 %v1100, %v1099
    %v1381 = vpack.c.b16 %v1102, %v1101
    %v1382 = vpack.c.b16 %v1104, %v1103
    %v1383 = vpack.c.b16 %v1106, %v1105
    %v1384 = vpack.c.b16 %v1108, %v1107
    %v1385 = vpack.c.b16 %v1110, %v1109
    %v1386 = vpack.c.b16 %v1112, %v1111
    %v1387 = vpack.c.b16 %v1114, %v1113
    %v1388 = vpack.c.b16 %v1116, %v1115
    %v1389 = vpack.c.b16 %v1118, %v1117
    %v1390 = vpack.c.b16 %v1120, %v1119
    %v1391 = vpack.c.b16 %v1122, %v1121
    %v1392 = vpack.c.b16 %v1124, %v1123
    %v1393 = vpack.c.b16 %v1126, %v1125
    %v1394 = vpack.c.b16 %v1128, %v1127
    %v1395 = vpack.c.b16 %v1130, %v1129
    %v1396 = vpack.c.b16 %v1132, %v1131
    %v1397 = vpack.c.b16 %v1134, %v1133
    %v1398 = vpack.c.b16 %v1136, %v1135
    %v1399 = vpack.c.b16 %v1138, %v1137
    %v1400 = vpack.c.b16 %v1140, %v1139
    %v1401 = vpack.c.b16 %v1142, %v1141
    %v1402 = vpack.c.b16 %v1144, %v1143
    %v1403 = vpack.c.b16 %v1146, %v1145
    %v1404 = vpack.c.b16 %v1148, %v1147
    %v1405 = vpack.c.b16 %v1150, %v1149
    %v1406 = vpack.c.b16 %v1152, %v1151
    %v1407 = vpack.c.b16 %v1154, %v1153
    %v1408 = vpack.c.b16 %v1156, %v1155
    %v1409 = vpack.c.b16 %v1158, %v1157
    %v1410 = vpack.c.b16 %v1160, %v1159
    %v1411 = vpack.c.b16 %v1162, %v1161
    %v1412 = vpack.c.b16 %v1164, %v1163
    %v1413 = vpack.c.b16 %v1166, %v1165
    %v1414 = vpack.c.b16 %v1168, %v1167
    %v1415 = vpack.c.b16 %v1170, %v1169
    %v1416 = vpack.c.b16 %v1172, %v1171
    %v1417 = vpack.c.b16 %v1174, %v1173
    %v1418 = vpack.c.b16 %v1176, %v1175
    %v1419 = vpack.c.b16 %v1178, %v1177
    %v1420 = vpack.c.b16 %v1180, %v1179
    %v1421 = vpack.c.b16 %v1182, %v1181
    %v1422 = vpack.c.b16 %v1184, %v1183
    %v1423 = vpack.c.b16 %v1186, %v1185
    %v1424 = vpack.c.b16 %v1188, %v1187
    %v1425 = vpack.c.b16 %v1190, %v1189
    %v1426 = vpack.c.b16 %v1192, %v1191
    %v1427 = vpack.c.b16 %v1194, %v1193
    %v1428 = vpack.c.b16 %v1196, %v1195
    %v1429 = vpack.c.b16 %v1198, %v1197
    %v1430 = vpack.c.b16 %v1200, %v1199
    %v1431 = vpack.c.b16 %v1202, %v1201
    %v1432 = vpack.c.b16 %v1204, %v1203
    %v1433 = vpack.c.b16 %v1206, %v1205
    %v1434 = vpack.c.b16 %v1208, %v1207
    %v1435 = vpack.c.b16 %v1210, %v1209
    %v1436 = vpack.c.b16 %v1212, %v1211
    %v1437 = vpack.c.b16 %v1214, %v1213
    %v1438 = vpack.c.b16 %v1216, %v1215
    %v1439 = vpack.c.b16 %v1218, %v1217
    %v1440 = vpack.c.b16 %v1220, %v1219
    %v1441 = vpack.c.b16 %v1222, %v1221
    %v1442 = vpack.c.b16 %v1224, %v1223
    %v1443 = vpack.c.b16 %v1226, %v1225
    %v1444 = vpack.c.b16 %v1228, %v1227
    %v1445 = vpack.c.b16 %v1230, %v1229
    %v1446 = vpack.c.b16 %v1232, %v1231
    %v1447 = vpack.c.b16 %v1234, %v1233
    %v1448 = vpack.c.b16 %v1236, %v1235
    %v1449 = vpack.c.b16 %v1238, %v1237
    %v1450 = vpack.c.b16 %v1240, %v1239
    %v1451 = vpack.c.b16 %v1242, %v1241
    %v1452 = vpack.c.b16 %v1244, %v1243
    %v1453 = vpack.c.b16 %v1246, %v1245
    %v1454 = vpack.c.b16 %v1248, %v1247
    %v1455 = vpack.c.b16 %v1250, %v1249
    %v1456 = vpack.c.b16 %v1252, %v1251
    %v1457 = vpack.c.b16 %v1254, %v1253
    %v1458 = vpack.c.b16 %v1256, %v1255
    %v1459 = vpack.c.b16 %v1258, %v1257
    %v1460 = vpack.c.b16 %v1260, %v1259
    %v1461 = vpack.c.b16 %v1262, %v1261
    %v1462 = vpack.c.b16 %v1264, %v1263
    %v1463 = vpack.c.b16 %v1266, %v1265
    %v1464 = vpack.c.b16 %v1268, %v1267
    %v1465 = vpack.c.b16 %v1270, %v1269
    %v1466 = vpack.c.b16 %v1272, %v1271
    %v1467 = vpack.c.b16 %v1274, %v1273
    %v1468 = vpack.c.b16 %v1276, %v1275
    %1661 = vmatprep.subr.bf16.mxu0 0
    %1662 = vmatpush1.bf16.msra.mxu0 %v1277
    %1663 = vmatprep.subr.bf16.mxu0 0
    %1664 = vmatpush1.bf16.msra.mxu0 %v1278
    %1665 = vmatprep.subr.bf16.mxu0 0
    %1666 = vmatpush1.bf16.msra.mxu0 %v1279
    %1667 = vmatprep.subr.bf16.mxu0 0
    %1668 = vmatpush1.bf16.msra.mxu0 %v1280
    %1669 = vmatprep.subr.bf16.mxu0 0
    %1670 = vmatpush1.bf16.msra.mxu0 %v1281
    %1671 = vmatprep.subr.bf16.mxu0 0
    %1672 = vmatpush1.bf16.msra.mxu0 %v1282
    %1673 = vmatprep.subr.bf16.mxu0 0
    %1674 = vmatpush1.bf16.msra.mxu0 %v1283
    %1675 = vmatprep.subr.bf16.mxu0 0
    %1676 = vmatpush1.bf16.msra.mxu0 %v1284
    %1677 = vmatprep.subr.bf16.mxu0 0
    %1678 = vmatpush1.bf16.msra.mxu0 %v1285
    %1679 = vmatprep.subr.bf16.mxu0 0
    %1680 = vmatpush1.bf16.msra.mxu0 %v1286
    %1681 = vmatprep.subr.bf16.mxu0 0
    %1682 = vmatpush1.bf16.msra.mxu0 %v1287
    %1683 = vmatprep.subr.bf16.mxu0 0
    %1684 = vmatpush1.bf16.msra.mxu0 %v1288
    %1685 = vmatprep.subr.bf16.mxu0 0
    %1686 = vmatpush1.bf16.msra.mxu0 %v1289
    %1687 = vmatprep.subr.bf16.mxu0 0
    %1688 = vmatpush1.bf16.msra.mxu0 %v1290
    %1689 = vmatprep.subr.bf16.mxu0 0
    %1690 = vmatpush1.bf16.msra.mxu0 %v1291
    %1691 = vmatprep.subr.bf16.mxu0 0
    %1692 = vmatpush1.bf16.msra.mxu0 %v1292
    %1693 = vmatprep.mubr.bf16.mxu0 %v462
    %1694 = vmatmul.mubr.bf16.gmra.mrb[0].mxu0 %v461
    %v1695 = vpop.f32.mrb[0].mxu0
    %v1696 = vadd.f32 %v423, %v1695
    %v1697 = vpop.f32.mrb[0].mxu0
    %v1698 = vpop.f32.mrb[0].mxu0
    %v1699 = vpop.f32.mrb[0].mxu0
    %1700 = vdwg.mxu0
    %1701 = vmatprep.subr.bf16.mxu0 0
    %1702 = vmatpush1.bf16.msra.mxu0 %v1293
    %1703 = vmatprep.subr.bf16.mxu0 0
    %1704 = vmatpush1.bf16.msra.mxu0 %v1294
    %1705 = vmatprep.subr.bf16.mxu0 0
    %1706 = vmatpush1.bf16.msra.mxu0 %v1295
    %1707 = vmatprep.subr.bf16.mxu0 0
    %1708 = vmatpush1.bf16.msra.mxu0 %v1296
    %1709 = vmatprep.subr.bf16.mxu0 0
    %1710 = vmatpush1.bf16.msra.mxu0 %v1297
    %1711 = vmatprep.subr.bf16.mxu0 0
    %1712 = vmatpush1.bf16.msra.mxu0 %v1298
    %1713 = vmatprep.subr.bf16.mxu0 0
    %1714 = vmatpush1.bf16.msra.mxu0 %v1299
    %1715 = vmatprep.subr.bf16.mxu0 0
    %1716 = vmatpush1.bf16.msra.mxu0 %v1300
    %1717 = vmatprep.subr.bf16.mxu0 0
    %1718 = vmatpush1.bf16.msra.mxu0 %v1301
    %1719 = vmatprep.subr.bf16.mxu0 0
    %1720 = vmatpush1.bf16.msra.mxu0 %v1302
    %1721 = vmatprep.subr.bf16.mxu0 0
    %1722 = vmatpush1.bf16.msra.mxu0 %v1303
    %1723 = vmatprep.subr.bf16.mxu0 0
    %1724 = vmatpush1.bf16.msra.mxu0 %v1304
    %1725 = vmatprep.subr.bf16.mxu0 0
    %1726 = vmatpush1.bf16.msra.mxu0 %v1305
    %1727 = vmatprep.subr.bf16.mxu0 0
    %1728 = vmatpush1.bf16.msra.mxu0 %v1306
    %1729 = vmatprep.subr.bf16.mxu0 0
    %1730 = vmatpush1.bf16.msra.mxu0 %v1307
    %1731 = vmatprep.subr.bf16.mxu0 0
    %1732 = vmatpush1.bf16.msra.mxu0 %v1308
    %1733 = vmatprep.mubr.bf16.mxu0 %v464
    %1734 = vmatmul.mubr.bf16.gmra.mrb[0].mxu0 %v463
    %v1735 = vpop.f32.mrb[0].mxu0
    %v1736 = vadd.f32 %v1696, %v1735
    %v1737 = vpop.f32.mrb[0].mxu0
    %v1738 = vpop.f32.mrb[0].mxu0
    %v1739 = vpop.f32.mrb[0].mxu0
    %1740 = vdwg.mxu0
    %1741 = vmatprep.subr.bf16.mxu0 0
    %1742 = vmatpush1.bf16.msra.mxu0 %v1309
    %1743 = vmatprep.subr.bf16.mxu0 0
    %1744 = vmatpush1.bf16.msra.mxu0 %v1310
    %1745 = vmatprep.subr.bf16.mxu0 0
    %1746 = vmatpush1.bf16.msra.mxu0 %v1311
    %1747 = vmatprep.subr.bf16.mxu0 0
    %1748 = vmatpush1.bf16.msra.mxu0 %v1312
    %1749 = vmatprep.subr.bf16.mxu0 0
    %1750 = vmatpush1.bf16.msra.mxu0 %v1313
    %1751 = vmatprep.subr.bf16.mxu0 0
    %1752 = vmatpush1.bf16.msra.mxu0 %v1314
    %1753 = vmatprep.subr.bf16.mxu0 0
    %1754 = vmatpush1.bf16.msra.mxu0 %v1315
    %1755 = vmatprep.subr.bf16.mxu0 0
    %1756 = vmatpush1.bf16.msra.mxu0 %v1316
    %1757 = vmatprep.subr.bf16.mxu0 0
    %1758 = vmatpush1.bf16.msra.mxu0 %v1317
    %1759 = vmatprep.subr.bf16.mxu0 0
    %1760 = vmatpush1.bf16.msra.mxu0 %v1318
    %1761 = vmatprep.subr.bf16.mxu0 0
    %1762 = vmatpush1.bf16.msra.mxu0 %v1319
    %1763 = vmatprep.subr.bf16.mxu0 0
    %1764 = vmatpush1.bf16.msra.mxu0 %v1320
    %1765 = vmatprep.subr.bf16.mxu0 0
    %1766 = vmatpush1.bf16.msra.mxu0 %v1321
    %1767 = vmatprep.subr.bf16.mxu0 0
    %1768 = vmatpush1.bf16.msra.mxu0 %v1322
    %1769 = vmatprep.subr.bf16.mxu0 0
    %1770 = vmatpush1.bf16.msra.mxu0 %v1323
    %1771 = vmatprep.subr.bf16.mxu0 0
    %1772 = vmatpush1.bf16.msra.mxu0 %v1324
    %1773 = vmatprep.mubr.bf16.mxu0 %v466
    %1774 = vmatmul.mubr.bf16.gmra.mrb[0].mxu0 %v465
    %v1775 = vpop.f32.mrb[0].mxu0
    %v1776 = vadd.f32 %v1736, %v1775
    %v1777 = vpop.f32.mrb[0].mxu0
    %v1778 = vpop.f32.mrb[0].mxu0
    %v1779 = vpop.f32.mrb[0].mxu0
    %1780 = vdwg.mxu0
    %1781 = vmatprep.subr.bf16.mxu0 0
    %1782 = vmatpush1.bf16.msra.mxu0 %v1325
    %1783 = vmatprep.subr.bf16.mxu0 0
    %1784 = vmatpush1.bf16.msra.mxu0 %v1326
    %1785 = vmatprep.subr.bf16.mxu0 0
    %1786 = vmatpush1.bf16.msra.mxu0 %v1327
    %1787 = vmatprep.subr.bf16.mxu0 0
    %1788 = vmatpush1.bf16.msra.mxu0 %v1328
    %1789 = vmatprep.subr.bf16.mxu0 0
    %1790 = vmatpush1.bf16.msra.mxu0 %v1329
    %1791 = vmatprep.subr.bf16.mxu0 0
    %1792 = vmatpush1.bf16.msra.mxu0 %v1330
    %1793 = vmatprep.subr.bf16.mxu0 0
    %1794 = vmatpush1.bf16.msra.mxu0 %v1331
    %1795 = vmatprep.subr.bf16.mxu0 0
    %1796 = vmatpush1.bf16.msra.mxu0 %v1332
    %1797 = vmatprep.subr.bf16.mxu0 0
    %1798 = vmatpush1.bf16.msra.mxu0 %v1333
    %1799 = vmatprep.subr.bf16.mxu0 0
    %1800 = vmatpush1.bf16.msra.mxu0 %v1334
    %1801 = vmatprep.subr.bf16.mxu0 0
    %1802 = vmatpush1.bf16.msra.mxu0 %v1335
    %1803 = vmatprep.subr.bf16.mxu0 0
    %1804 = vmatpush1.bf16.msra.mxu0 %v1336
    %1805 = vmatprep.subr.bf16.mxu0 0
    %1806 = vmatpush1.bf16.msra.mxu0 %v1337
    %1807 = vmatprep.subr.bf16.mxu0 0
    %1808 = vmatpush1.bf16.msra.mxu0 %v1338
    %1809 = vmatprep.subr.bf16.mxu0 0
    %1810 = vmatpush1.bf16.msra.mxu0 %v1339
    %1811 = vmatprep.subr.bf16.mxu0 0
    %1812 = vmatpush1.bf16.msra.mxu0 %v1340
    %1813 = vmatprep.mubr.bf16.mxu0 %v468
    %1814 = vmatmul.mubr.bf16.gmra.mrb[0].mxu0 %v467
    %v1815 = vpop.f32.mrb[0].mxu0
    %v1816 = vadd.f32 %v1776, %v1815
    %v1817 = vpop.f32.mrb[0].mxu0
    %v1818 = vpop.f32.mrb[0].mxu0
    %v1819 = vpop.f32.mrb[0].mxu0
    %1820 = vdwg.mxu0
    %1821 = vmatprep.subr.bf16.mxu0 0
    %1822 = vmatpush1.bf16.msra.mxu0 %v1341
    %1823 = vmatprep.subr.bf16.mxu0 0
    %1824 = vmatpush1.bf16.msra.mxu0 %v1342
    %1825 = vmatprep.subr.bf16.mxu0 0
    %1826 = vmatpush1.bf16.msra.mxu0 %v1343
    %1827 = vmatprep.subr.bf16.mxu0 0
    %1828 = vmatpush1.bf16.msra.mxu0 %v1344
    %1829 = vmatprep.subr.bf16.mxu0 0
    %1830 = vmatpush1.bf16.msra.mxu0 %v1345
    %1831 = vmatprep.subr.bf16.mxu0 0
    %1832 = vmatpush1.bf16.msra.mxu0 %v1346
    %1833 = vmatprep.subr.bf16.mxu0 0
    %1834 = vmatpush1.bf16.msra.mxu0 %v1347
    %1835 = vmatprep.subr.bf16.mxu0 0
    %1836 = vmatpush1.bf16.msra.mxu0 %v1348
    %1837 = vmatprep.subr.bf16.mxu0 0
    %1838 = vmatpush1.bf16.msra.mxu0 %v1349
    %1839 = vmatprep.subr.bf16.mxu0 0
    %1840 = vmatpush1.bf16.msra.mxu0 %v1350
    %1841 = vmatprep.subr.bf16.mxu0 0
    %1842 = vmatpush1.bf16.msra.mxu0 %v1351
    %1843 = vmatprep.subr.bf16.mxu0 0
    %1844 = vmatpush1.bf16.msra.mxu0 %v1352
    %1845 = vmatprep.subr.bf16.mxu0 0
    %1846 = vmatpush1.bf16.msra.mxu0 %v1353
    %1847 = vmatprep.subr.bf16.mxu0 0
    %1848 = vmatpush1.bf16.msra.mxu0 %v1354
    %1849 = vmatprep.subr.bf16.mxu0 0
    %1850 = vmatpush1.bf16.msra.mxu0 %v1355
    %1851 = vmatprep.subr.bf16.mxu0 0
    %1852 = vmatpush1.bf16.msra.mxu0 %v1356
    %1853 = vmatprep.mubr.bf16.mxu0 %v470
    %1854 = vmatmul.mubr.bf16.gmra.mrb[0].mxu0 %v469
    %v1855 = vpop.f32.mrb[0].mxu0
    %v1856 = vadd.f32 %v1816, %v1855
    %v1857 = vpop.f32.mrb[0].mxu0
    %v1858 = vpop.f32.mrb[0].mxu0
    %v1859 = vpop.f32.mrb[0].mxu0
    %1860 = vdwg.mxu0
    %1861 = vmatprep.subr.bf16.mxu0 0
    %1862 = vmatpush1.bf16.msra.mxu0 %v1357
    %1863 = vmatprep.subr.bf16.mxu0 0
    %1864 = vmatpush1.bf16.msra.mxu0 %v1358
    %1865 = vmatprep.subr.bf16.mxu0 0
    %1866 = vmatpush1.bf16.msra.mxu0 %v1359
    %1867 = vmatprep.subr.bf16.mxu0 0
    %1868 = vmatpush1.bf16.msra.mxu0 %v1360
    %1869 = vmatprep.subr.bf16.mxu0 0
    %1870 = vmatpush1.bf16.msra.mxu0 %v1361
    %1871 = vmatprep.subr.bf16.mxu0 0
    %1872 = vmatpush1.bf16.msra.mxu0 %v1362
    %1873 = vmatprep.subr.bf16.mxu0 0
    %1874 = vmatpush1.bf16.msra.mxu0 %v1363
    %1875 = vmatprep.subr.bf16.mxu0 0
    %1876 = vmatpush1.bf16.msra.mxu0 %v1364
    %1877 = vmatprep.subr.bf16.mxu0 0
    %1878 = vmatpush1.bf16.msra.mxu0 %v1365
    %1879 = vmatprep.subr.bf16.mxu0 0
    %1880 = vmatpush1.bf16.msra.mxu0 %v1366
    %1881 = vmatprep.subr.bf16.mxu0 0
    %1882 = vmatpush1.bf16.msra.mxu0 %v1367
    %1883 = vmatprep.subr.bf16.mxu0 0
    %1884 = vmatpush1.bf16.msra.mxu0 %v1368
    %1885 = vmatprep.subr.bf16.mxu0 0
    %1886 = vmatpush1.bf16.msra.mxu0 %v1369
    %1887 = vmatprep.subr.bf16.mxu0 0
    %1888 = vmatpush1.bf16.msra.mxu0 %v1370
    %1889 = vmatprep.subr.bf16.mxu0 0
    %1890 = vmatpush1.bf16.msra.mxu0 %v1371
    %1891 = vmatprep.subr.bf16.mxu0 0
    %1892 = vmatpush1.bf16.msra.mxu0 %v1372
    %1893 = vmatprep.mubr.bf16.mxu0 %v472
    %1894 = vmatmul.mubr.bf16.gmra.mrb[0].mxu0 %v471
    %v1895 = vpop.f32.mrb[0].mxu0
    %v1896 = vadd.f32 %v1856, %v1895
    %v1897 = vpop.f32.mrb[0].mxu0
    %v1898 = vpop.f32.mrb[0].mxu0
    %v1899 = vpop.f32.mrb[0].mxu0
    %1900 = vdwg.mxu0
    %1901 = vmatprep.subr.bf16.mxu0 0
    %1902 = vmatpush1.bf16.msra.mxu0 %v1373
    %1903 = vmatprep.subr.bf16.mxu0 0
    %1904 = vmatpush1.bf16.msra.mxu0 %v1374
    %1905 = vmatprep.subr.bf16.mxu0 0
    %1906 = vmatpush1.bf16.msra.mxu0 %v1375
    %1907 = vmatprep.subr.bf16.mxu0 0
    %1908 = vmatpush1.bf16.msra.mxu0 %v1376
    %1909 = vmatprep.subr.bf16.mxu0 0
    %1910 = vmatpush1.bf16.msra.mxu0 %v1377
    %1911 = vmatprep.subr.bf16.mxu0 0
    %1912 = vmatpush1.bf16.msra.mxu0 %v1378
    %1913 = vmatprep.subr.bf16.mxu0 0
    %1914 = vmatpush1.bf16.msra.mxu0 %v1379
    %1915 = vmatprep.subr.bf16.mxu0 0
    %1916 = vmatpush1.bf16.msra.mxu0 %v1380
    %1917 = vmatprep.subr.bf16.mxu0 0
    %1918 = vmatpush1.bf16.msra.mxu0 %v1381
    %1919 = vmatprep.subr.bf16.mxu0 0
    %1920 = vmatpush1.bf16.msra.mxu0 %v1382
    %1921 = vmatprep.subr.bf16.mxu0 0
    %1922 = vmatpush1.bf16.msra.mxu0 %v1383
    %1923 = vmatprep.subr.bf16.mxu0 0
    %1924 = vmatpush1.bf16.msra.mxu0 %v1384
    %1925 = vmatprep.subr.bf16.mxu0 0
    %1926 = vmatpush1.bf16.msra.mxu0 %v1385
    %1927 = vmatprep.subr.bf16.mxu0 0
    %1928 = vmatpush1.bf16.msra.mxu0 %v1386
    %1929 = vmatprep.subr.bf16.mxu0 0
    %1930 = vmatpush1.bf16.msra.mxu0 %v1387
    %1931 = vmatprep.subr.bf16.mxu0 0
    %1932 = vmatpush1.bf16.msra.mxu0 %v1388
    %1933 = vmatprep.mubr.bf16.mxu0 %v474
    %1934 = vmatmul.mubr.bf16.gmra.mrb[0].mxu0 %v473
    %v1935 = vpop.f32.mrb[0].mxu0
    %v1936 = vadd.f32 %v1896, %v1935
    %v1937 = vpop.f32.mrb[0].mxu0
    %v1938 = vpop.f32.mrb[0].mxu0
    %v1939 = vpop.f32.mrb[0].mxu0
    %1940 = vdwg.mxu0
    %1941 = vmatprep.subr.bf16.mxu0 0
    %1942 = vmatpush1.bf16.msra.mxu0 %v1389
    %1943 = vmatprep.subr.bf16.mxu0 0
    %1944 = vmatpush1.bf16.msra.mxu0 %v1390
    %1945 = vmatprep.subr.bf16.mxu0 0
    %1946 = vmatpush1.bf16.msra.mxu0 %v1391
    %1947 = vmatprep.subr.bf16.mxu0 0
    %1948 = vmatpush1.bf16.msra.mxu0 %v1392
    %1949 = vmatprep.subr.bf16.mxu0 0
    %1950 = vmatpush1.bf16.msra.mxu0 %v1393
    %1951 = vmatprep.subr.bf16.mxu0 0
    %1952 = vmatpush1.bf16.msra.mxu0 %v1394
    %1953 = vmatprep.subr.bf16.mxu0 0
    %1954 = vmatpush1.bf16.msra.mxu0 %v1395
    %1955 = vmatprep.subr.bf16.mxu0 0
    %1956 = vmatpush1.bf16.msra.mxu0 %v1396
    %1957 = vmatprep.subr.bf16.mxu0 0
    %1958 = vmatpush1.bf16.msra.mxu0 %v1397
    %1959 = vmatprep.subr.bf16.mxu0 0
    %1960 = vmatpush1.bf16.msra.mxu0 %v1398
    %1961 = vmatprep.subr.bf16.mxu0 0
    %1962 = vmatpush1.bf16.msra.mxu0 %v1399
    %1963 = vmatprep.subr.bf16.mxu0 0
    %1964 = vmatpush1.bf16.msra.mxu0 %v1400
    %1965 = vmatprep.subr.bf16.mxu0 0
    %1966 = vmatpush1.bf16.msra.mxu0 %v1401
    %1967 = vmatprep.subr.bf16.mxu0 0
    %1968 = vmatpush1.bf16.msra.mxu0 %v1402
    %1969 = vmatprep.subr.bf16.mxu0 0
    %1970 = vmatpush1.bf16.msra.mxu0 %v1403
    %1971 = vmatprep.subr.bf16.mxu0 0
    %1972 = vmatpush1.bf16.msra.mxu0 %v1404
    %1973 = vmatprep.mubr.bf16.mxu0 %v476
    %1974 = vmatmul.mubr.bf16.gmra.mrb[0].mxu0 %v475
    %v1975 = vpop.f32.mrb[0].mxu0
    %v1976 = vadd.f32 %v1936, %v1975
    %v1977 = vpop.f32.mrb[0].mxu0
    %v1978 = vpop.f32.mrb[0].mxu0
    %v1979 = vpop.f32.mrb[0].mxu0
    %1980 = vdwg.mxu0
    %1981 = vmatprep.subr.bf16.mxu0 0
    %1982 = vmatpush1.bf16.msra.mxu0 %v1405
    %1983 = vmatprep.subr.bf16.mxu0 0
    %1984 = vmatpush1.bf16.msra.mxu0 %v1406
    %1985 = vmatprep.subr.bf16.mxu0 0
    %1986 = vmatpush1.bf16.msra.mxu0 %v1407
    %1987 = vmatprep.subr.bf16.mxu0 0
    %1988 = vmatpush1.bf16.msra.mxu0 %v1408
    %1989 = vmatprep.subr.bf16.mxu0 0
    %1990 = vmatpush1.bf16.msra.mxu0 %v1409
    %1991 = vmatprep.subr.bf16.mxu0 0
    %1992 = vmatpush1.bf16.msra.mxu0 %v1410
    %1993 = vmatprep.subr.bf16.mxu0 0
    %1994 = vmatpush1.bf16.msra.mxu0 %v1411
    %1995 = vmatprep.subr.bf16.mxu0 0
    %1996 = vmatpush1.bf16.msra.mxu0 %v1412
    %1997 = vmatprep.subr.bf16.mxu0 0
    %1998 = vmatpush1.bf16.msra.mxu0 %v1413
    %1999 = vmatprep.subr.bf16.mxu0 0
    %2000 = vmatpush1.bf16.msra.mxu0 %v1414
    %2001 = vmatprep.subr.bf16.mxu0 0
    %2002 = vmatpush1.bf16.msra.mxu0 %v1415
    %2003 = vmatprep.subr.bf16.mxu0 0
    %2004 = vmatpush1.bf16.msra.mxu0 %v1416
    %2005 = vmatprep.subr.bf16.mxu0 0
    %2006 = vmatpush1.bf16.msra.mxu0 %v1417
    %2007 = vmatprep.subr.bf16.mxu0 0
    %2008 = vmatpush1.bf16.msra.mxu0 %v1418
    %2009 = vmatprep.subr.bf16.mxu0 0
    %2010 = vmatpush1.bf16.msra.mxu0 %v1419
    %2011 = vmatprep.subr.bf16.mxu0 0
    %2012 = vmatpush1.bf16.msra.mxu0 %v1420
    %2013 = vmatprep.mubr.bf16.mxu0 %v478
    %2014 = vmatmul.mubr.bf16.gmra.mrb[0].mxu0 %v477
    %v2015 = vpop.f32.mrb[0].mxu0
    %v2016 = vadd.f32 %v1976, %v2015
    %v2017 = vpop.f32.mrb[0].mxu0
    %v2018 = vpop.f32.mrb[0].mxu0
    %v2019 = vpop.f32.mrb[0].mxu0
    %2020 = vdwg.mxu0
    %2021 = vmatprep.subr.bf16.mxu0 0
    %2022 = vmatpush1.bf16.msra.mxu0 %v1421
    %2023 = vmatprep.subr.bf16.mxu0 0
    %2024 = vmatpush1.bf16.msra.mxu0 %v1422
    %2025 = vmatprep.subr.bf16.mxu0 0
    %2026 = vmatpush1.bf16.msra.mxu0 %v1423
    %2027 = vmatprep.subr.bf16.mxu0 0
    %2028 = vmatpush1.bf16.msra.mxu0 %v1424
    %2029 = vmatprep.subr.bf16.mxu0 0
    %2030 = vmatpush1.bf16.msra.mxu0 %v1425
    %2031 = vmatprep.subr.bf16.mxu0 0
    %2032 = vmatpush1.bf16.msra.mxu0 %v1426
    %2033 = vmatprep.subr.bf16.mxu0 0
    %2034 = vmatpush1.bf16.msra.mxu0 %v1427
    %2035 = vmatprep.subr.bf16.mxu0 0
    %2036 = vmatpush1.bf16.msra.mxu0 %v1428
    %2037 = vmatprep.subr.bf16.mxu0 0
    %2038 = vmatpush1.bf16.msra.mxu0 %v1429
    %2039 = vmatprep.subr.bf16.mxu0 0
    %2040 = vmatpush1.bf16.msra.mxu0 %v1430
    %2041 = vmatprep.subr.bf16.mxu0 0
    %2042 = vmatpush1.bf16.msra.mxu0 %v1431
    %2043 = vmatprep.subr.bf16.mxu0 0
    %2044 = vmatpush1.bf16.msra.mxu0 %v1432
    %2045 = vmatprep.subr.bf16.mxu0 0
    %2046 = vmatpush1.bf16.msra.mxu0 %v1433
    %2047 = vmatprep.subr.bf16.mxu0 0
    %2048 = vmatpush1.bf16.msra.mxu0 %v1434
    %2049 = vmatprep.subr.bf16.mxu0 0
    %2050 = vmatpush1.bf16.msra.mxu0 %v1435
    %2051 = vmatprep.subr.bf16.mxu0 0
    %2052 = vmatpush1.bf16.msra.mxu0 %v1436
    %2053 = vmatprep.mubr.bf16.mxu0 %v480
    %2054 = vmatmul.mubr.bf16.gmra.mrb[0].mxu0 %v479
    %v2055 = vpop.f32.mrb[0].mxu0
    %v2056 = vadd.f32 %v2016, %v2055
    %v2057 = vpop.f32.mrb[0].mxu0
    %v2058 = vpop.f32.mrb[0].mxu0
    %v2059 = vpop.f32.mrb[0].mxu0
    %2060 = vdwg.mxu0
    %2061 = vmatprep.subr.bf16.mxu0 0
    %2062 = vmatpush1.bf16.msra.mxu0 %v1437
    %2063 = vmatprep.subr.bf16.mxu0 0
    %2064 = vmatpush1.bf16.msra.mxu0 %v1438
    %2065 = vmatprep.subr.bf16.mxu0 0
    %2066 = vmatpush1.bf16.msra.mxu0 %v1439
    %2067 = vmatprep.subr.bf16.mxu0 0
    %2068 = vmatpush1.bf16.msra.mxu0 %v1440
    %2069 = vmatprep.subr.bf16.mxu0 0
    %2070 = vmatpush1.bf16.msra.mxu0 %v1441
    %2071 = vmatprep.subr.bf16.mxu0 0
    %2072 = vmatpush1.bf16.msra.mxu0 %v1442
    %2073 = vmatprep.subr.bf16.mxu0 0
    %2074 = vmatpush1.bf16.msra.mxu0 %v1443
    %2075 = vmatprep.subr.bf16.mxu0 0
    %2076 = vmatpush1.bf16.msra.mxu0 %v1444
    %2077 = vmatprep.subr.bf16.mxu0 0
    %2078 = vmatpush1.bf16.msra.mxu0 %v1445
    %2079 = vmatprep.subr.bf16.mxu0 0
    %2080 = vmatpush1.bf16.msra.mxu0 %v1446
    %2081 = vmatprep.subr.bf16.mxu0 0
    %2082 = vmatpush1.bf16.msra.mxu0 %v1447
    %2083 = vmatprep.subr.bf16.mxu0 0
    %2084 = vmatpush1.bf16.msra.mxu0 %v1448
    %2085 = vmatprep.subr.bf16.mxu0 0
    %2086 = vmatpush1.bf16.msra.mxu0 %v1449
    %2087 = vmatprep.subr.bf16.mxu0 0
    %2088 = vmatpush1.bf16.msra.mxu0 %v1450
    %2089 = vmatprep.subr.bf16.mxu0 0
    %2090 = vmatpush1.bf16.msra.mxu0 %v1451
    %2091 = vmatprep.subr.bf16.mxu0 0
    %2092 = vmatpush1.bf16.msra.mxu0 %v1452
    %2093 = vmatprep.mubr.bf16.mxu0 %v482
    %2094 = vmatmul.mubr.bf16.gmra.mrb[0].mxu0 %v481
    %v2095 = vpop.f32.mrb[0].mxu0
    %v2096 = vadd.f32 %v2056, %v2095
    %v2097 = vpop.f32.mrb[0].mxu0
    %v2098 = vpop.f32.mrb[0].mxu0
    %v2099 = vpop.f32.mrb[0].mxu0
    %2100 = vdwg.mxu0
    %2101 = vmatprep.subr.bf16.mxu0 0
    %2102 = vmatpush1.bf16.msra.mxu0 %v1453
    %2103 = vmatprep.subr.bf16.mxu0 0
    %2104 = vmatpush1.bf16.msra.mxu0 %v1454
    %2105 = vmatprep.subr.bf16.mxu0 0
    %2106 = vmatpush1.bf16.msra.mxu0 %v1455
    %2107 = vmatprep.subr.bf16.mxu0 0
    %2108 = vmatpush1.bf16.msra.mxu0 %v1456
    %2109 = vmatprep.subr.bf16.mxu0 0
    %2110 = vmatpush1.bf16.msra.mxu0 %v1457
    %2111 = vmatprep.subr.bf16.mxu0 0
    %2112 = vmatpush1.bf16.msra.mxu0 %v1458
    %2113 = vmatprep.subr.bf16.mxu0 0
    %2114 = vmatpush1.bf16.msra.mxu0 %v1459
    %2115 = vmatprep.subr.bf16.mxu0 0
    %2116 = vmatpush1.bf16.msra.mxu0 %v1460
    %2117 = vmatprep.subr.bf16.mxu0 0
    %2118 = vmatpush1.bf16.msra.mxu0 %v1461
    %2119 = vmatprep.subr.bf16.mxu0 0
    %2120 = vmatpush1.bf16.msra.mxu0 %v1462
    %2121 = vmatprep.subr.bf16.mxu0 0
    %2122 = vmatpush1.bf16.msra.mxu0 %v1463
    %2123 = vmatprep.subr.bf16.mxu0 0
    %2124 = vmatpush1.bf16.msra.mxu0 %v1464
    %2125 = vmatprep.subr.bf16.mxu0 0
    %2126 = vmatpush1.bf16.msra.mxu0 %v1465
    %2127 = vmatprep.subr.bf16.mxu0 0
    %2128 = vmatpush1.bf16.msra.mxu0 %v1466
    %2129 = vmatprep.subr.bf16.mxu0 0
    %2130 = vmatpush1.bf16.msra.mxu0 %v1467
    %2131 = vmatprep.subr.bf16.mxu0 0
    %2132 = vmatpush1.bf16.msra.mxu0 %v1468
    %2133 = vmatprep.mubr.bf16.mxu0 %v484
    %2134 = vmatmul.mubr.bf16.gmra.mrb[0].mxu0 %v483
    %v2135 = vpop.f32.mrb[0].mxu0
    %v2136 = vadd.f32 %v2096, %v2135
    %v2137 = vpop.f32.mrb[0].mxu0
    %v2138 = vpop.f32.mrb[0].mxu0
    %v2139 = vpop.f32.mrb[0].mxu0
    %2140 = vdwg.mxu0
    %v2141 = vmax.f32 %v2136, 0.0
    %v2142 = vld [vmem:[%s3] sm:$0xf]
    %v2143 = vld [vmem:[%s3 + $0x4] sm:$0xf]
    %v2144 = vld [vmem:[%s3 + $0x8] sm:$0xf]
    %v2145 = vld [vmem:[%s3 + $0xc] sm:$0xf]
    %v2146 = vld [vmem:[%s4] sm:$0x1]
    %v2148 = vlaneseq
    %v2149 = vshrl.u32 %v2148, 7
    %v2150 = vsub.s32 0, %v2149
    %v2151 = vrot.slane %v2146, %v2150
    %v2157 = vunpack.c.l.b16 %v2142
    %v2158 = vunpack.c.l.b16 %v2143
    %v2159 = vunpack.c.l.b16 %v2144
    %v2160 = vunpack.c.l.b16 %v2145
    %v2161 = vpack.c.b16 %v2158, %v2157
    %v2162 = vpack.c.b16 %v2160, %v2159
    %vm2165 = vcmask 261120
    %v2167 = vsel %vm2165, %v2141, 0
    %2169 = vmatprep.subr.bf16.mxu0 0
    %2170 = vmatpush1.bf16.msra.mxu0 %v2161
    %2171 = vmatprep.subr.bf16.mxu0 0
    %2172 = vmatpush1.bf16.msra.mxu0 %v2162
    %2173 = vmatprep.subr.bf16.mxu0 0
    %2174 = vmatpush1.bf16.msra.mxu0 0
    %2175 = vmatprep.subr.bf16.mxu0 0
    %2176 = vmatpush1.bf16.msra.mxu0 0
    %2177 = vmatprep.subr.bf16.mxu0 0
    %2178 = vmatpush1.bf16.msra.mxu0 0
    %2179 = vmatprep.subr.bf16.mxu0 0
    %2180 = vmatpush1.bf16.msra.mxu0 0
    %2181 = vmatprep.subr.bf16.mxu0 0
    %2182 = vmatpush1.bf16.msra.mxu0 0
    %2183 = vmatprep.subr.bf16.mxu0 0
    %2184 = vmatpush1.bf16.msra.mxu0 0
    %2185 = vmatprep.subr.bf16.mxu0 0
    %2186 = vmatpush1.bf16.msra.mxu0 0
    %2187 = vmatprep.subr.bf16.mxu0 0
    %2188 = vmatpush1.bf16.msra.mxu0 0
    %2189 = vmatprep.subr.bf16.mxu0 0
    %2190 = vmatpush1.bf16.msra.mxu0 0
    %2191 = vmatprep.subr.bf16.mxu0 0
    %2192 = vmatpush1.bf16.msra.mxu0 0
    %2193 = vmatprep.subr.bf16.mxu0 0
    %2194 = vmatpush1.bf16.msra.mxu0 0
    %2195 = vmatprep.subr.bf16.mxu0 0
    %2196 = vmatpush1.bf16.msra.mxu0 0
    %2197 = vmatprep.subr.bf16.mxu0 0
    %2198 = vmatpush1.bf16.msra.mxu0 0
    %2199 = vmatprep.subr.bf16.mxu0 0
    %2200 = vmatpush1.bf16.msra.mxu0 0
    %2201 = vmatprep.mubr.f32.mxu0 0.0
    %2202 = vmatmul.mubr.f32.gmra.mrb[0].mxu0 %v2167
    %v2203 = vpop.f32.mrb[0].mxu0
    %v2204 = vadd.f32 %v2151, %v2203
    %v2205 = vpop.f32.mrb[0].mxu0
    %2206 = vdwg.mxu0
    %vm2207 = vcmask 80896
    %2208 = vst.msk [vmem:[#allocation2] sm:$0xff] %vm2207, %v2204
    // Predicated region
    $region22: #{tpu_custom_call.1} parent=1 // pred_check
      _
    $region23: #{tpu_custom_call.1} parent=1 // pred_check_branch
      %2210 = sbr.rel (0) target = $region25
    $region24: #{tpu_custom_call.1} parent=1 // pred_region
      %s2212 = ssub.s32 128, 128
      %2213 = vsyncadd [#allocation3], %s2212
      %s2215 = sshll.u32 [#allocation2], 4
      %s2216 = int_to_ptr.vmem [resolvable:$true] %s2215
      %2218 = dma.vmem_to_hbm [thread:$0]  %s2216, 128, %s5, [#allocation3]
    $region25: #{tpu_custom_call.1} parent=1 // pred_fallthru
      _
    // Predicated region
    $region26: #{tpu_custom_call.1} parent=1 // pred_check
      _
    $region27: #{tpu_custom_call.1} parent=1 // pred_check_branch
      %2220 = sbr.rel (0) target = $region29
    $region28: #{tpu_custom_call.1} parent=1 // pred_region
      %2221 = dma.done [#allocation3], 128
    $region29: #{tpu_custom_call.1} parent=1 // pred_fallthru
      _
    %2222 = vsyncpa [#allocation3], 1

</llo_original>
